<compile_context>
chip_gen: v7x
topology: tpu7x:2x2x1
jax: 0.10.0
libtpu: 0.0.40
codegen_flags: <defaults>
</compile_context>

<pallas_src>
import functools
import math

import jax
import jax.numpy as jnp
from jax.experimental import pallas as pl
from jax.experimental.pallas import tpu as pltpu


def _round_up(x, m):
    return ((x + m - 1) // m) * m


def _mlp_kernel(x_ref, w1_ref, b1_ref, w2_ref, b2_ref, o_ref, *, out_dim, matmul_dtype):
    # x_ref:  (TR, C)   row tile of flattened point features (native dtype)
    # w1_ref: (C, Hp)   first-layer weight, equalized-lr gain folded, matmul dtype
    # b1_ref: (1, Hp)   f32
    # w2_ref: (Hp, Op)  second-layer weight, lr gain AND sqrt(2) lrelu gain folded
    # b2_ref: (1, Op)   f32
    # o_ref:  (TR, O)   narrow (un-padded) output tile
    x = x_ref[...]
    if x.dtype != matmul_dtype:            # per-tile VPU cast only when needed
        x = x.astype(matmul_dtype)

    # Layer 1: MXU matmul with f32 accumulation; bias + leaky-ReLU in f32.
    h = jnp.dot(x, w1_ref[...], preferred_element_type=jnp.float32) + b1_ref[...]
    h = jnp.where(h >= 0.0, h, 0.2 * h)    # sqrt(2) gain is folded into w2_ref

    # Layer 2.
    y = jnp.dot(h.astype(matmul_dtype), w2_ref[...],
                preferred_element_type=jnp.float32) + b2_ref[...]

    # Store only the real output columns -> narrow HBM writeback.
    o_ref[...] = y[:, :out_dim].astype(o_ref.dtype)


def mlp_network_forward(point_features, params, *, tile_rows=2048,
                        matmul_dtype=jnp.bfloat16):
    """point_features: (N, M, C) -> dict(color=(N,M,output_dim), density=(N,M,1))."""
    N, M, C = point_features.shape
    w1, b1, w2, b2, lr_mul = (params["w1"], params["b1"], params["w2"],
                              params["b2"], params["lr_mul"])
    H = w1.shape[0]          # hidden_dim     (w1: (H, C), torch convention)
    O = w2.shape[0]          # 1 + output_dim

    # ---- Parameter setup (trace-time glue): fold gains, transpose, pad to lane width.
    Hp = _round_up(H, 128)   # MXU lane width for the hidden dim
    Op = _round_up(O, 128)   # MXU lane width for the 2nd matmul output (kernel-internal only)

    w1_eff = (w1 * (lr_mul / math.sqrt(C))).T                                   # (C, H)
    b1_eff = (b1 * lr_mul).reshape(1, H).astype(jnp.float32)                    # (1, H)
    # Fold the sqrt(2) lrelu gain into W2:  (g*h) @ W2 == h @ (g*W2)
    w2_eff = (w2 * (lr_mul * math.sqrt(2.0) / math.sqrt(H))).T                  # (H, O)
    b2_eff = (b2 * lr_mul).reshape(1, O).astype(jnp.float32)                    # (1, O)

    # Zero-pad hidden / output channels to full 128-lane width (numerics unchanged:
    # padded hidden channels are 0 and hit zero rows of w2; padded output columns
    # are never stored).  Weights go to the MXU operand dtype once, here.
    w1_eff = jnp.pad(w1_eff, ((0, 0), (0, Hp - H))).astype(matmul_dtype)
    b1_eff = jnp.pad(b1_eff, ((0, 0), (0, Hp - H)))
    w2_eff = jnp.pad(w2_eff, ((0, Hp - H), (0, Op - O))).astype(matmul_dtype)
    b2_eff = jnp.pad(b2_eff, ((0, 0), (0, Op - O)))

    # ---- Row tiling: no host-side padding; ragged last block handled by Pallas.
    R = N * M
    x = point_features.reshape(R, C)

    tile_rows = _round_up(max(int(tile_rows), 8), 8)
    # Keep grid_r >= 2 when R permits so the "parallel" axis can shard across
    # both v7x TensorCores; large tiles otherwise amortize per-step overhead.
    tile_rows = max(8, min(tile_rows, _round_up(pl.cdiv(R, 2), 8)))
    grid_r = pl.cdiv(R, tile_rows)

    in_bytes = jnp.dtype(point_features.dtype).itemsize
    wt_bytes = jnp.dtype(matmul_dtype).itemsize
    cost = pl.CostEstimate(
        flops=2 * R * (C * Hp + Hp * Op),
        transcendentals=0,
        bytes_accessed=R * (C + O) * in_bytes
        + (C * Hp + Hp * Op) * wt_bytes
        + (Hp + Op) * 4,
    )

    kernel = functools.partial(_mlp_kernel, out_dim=O, matmul_dtype=matmul_dtype)

    y = pl.pallas_call(
        kernel,
        out_shape=jax.ShapeDtypeStruct((R, O), point_features.dtype),
        grid_spec=pltpu.PrefetchScalarGridSpec(
            num_scalar_prefetch=0,
            grid=(grid_r,),
            in_specs=[
                pl.BlockSpec((tile_rows, C), lambda i: (i, 0)),
                pl.BlockSpec((C, Hp), lambda i: (0, 0)),
                pl.BlockSpec((1, Hp), lambda i: (0, 0)),
                pl.BlockSpec((Hp, Op), lambda i: (0, 0)),
                pl.BlockSpec((1, Op), lambda i: (0, 0)),
            ],
            # Narrow output: last dim == full array dim (O), so no 128 padding needed.
            out_specs=pl.BlockSpec((tile_rows, O), lambda i: (i, 0)),
        ),
        compiler_params=pltpu.CompilerParams(
            dimension_semantics=("parallel",),
            # Safe on v7x (64 MiB physical); per-step footprint here is only a
            # few MiB even at tile_rows=8192.
            vmem_limit_bytes=32 * 1024 * 1024,
        ),
        cost_estimate=cost,
    )(x, w1_eff, b1_eff, w2_eff, b2_eff)

    y = y.reshape(N, M, O)
    return {"color": y[..., :-1], "density": y[..., -1:]}


def _reference_forward(point_features, params):
    """Pure-JAX reference matching the PyTorch module (f32)."""
    N, M, C = point_features.shape
    w1, b1, w2, b2, lr_mul = (params["w1"], params["b1"], params["w2"],
                              params["b2"], params["lr_mul"])
    H = w1.shape[0]
    x = point_features.reshape(N * M, C).astype(jnp.float32)
    h = x @ (w1 * (lr_mul / math.sqrt(C))).T + (b1 * lr_mul)[None, :]
    h = jnp.where(h >= 0.0, h, 0.2 * h) * math.sqrt(2.0)
    y = h @ (w2 * (lr_mul / math.sqrt(H))).T + (b2 * lr_mul)[None, :]
    y = y.reshape(N, M, -1)
    return {"color": y[..., :-1], "density": y[..., -1:]}


def init_params(key, input_dim, hidden_dim, output_dim, lr_mul):
    """Matches torch init: weight = randn(out, in) / lr_mul, bias = 0."""
    k1, k2 = jax.random.split(key)
    return {
        "w1": jax.random.normal(k1, (hidden_dim, input_dim), jnp.float32) / lr_mul,
        "b1": jnp.zeros((hidden_dim,), jnp.float32),
        "w2": jax.random.normal(k2, (1 + output_dim, hidden_dim), jnp.float32) / lr_mul,
        "b2": jnp.zeros((1 + output_dim,), jnp.float32),
        "lr_mul": float(lr_mul),
    }


if __name__ == "__main__":
    key = jax.random.PRNGKey(0)
    kx, kp = jax.random.split(key)

    # Small shapes: N=2 batches, M=500 points each (ragged vs tile_rows on purpose),
    # input_dim=32, hidden=64, output_dim=3.
    N, M = 2, 500
    input_dim, hidden_dim, output_dim, lr_mul = 32, 64, 3, 0.1

    point_features = jax.random.normal(kx, (N, M, input_dim), jnp.float32)
    params = init_params(kp, input_dim, hidden_dim, output_dim, lr_mul)

    ref = _reference_forward(point_features, params)

    # Exact-path check: f32 MXU operands, tight tolerance vs. literal reference.
    out_f32 = mlp_network_forward(point_features, params, matmul_dtype=jnp.float32)
    jax.block_until_ready(out_f32)
    assert out_f32["color"].shape == (N, M, output_dim)
    assert out_f32["density"].shape == (N, M, 1)
    assert jnp.allclose(out_f32["color"], ref["color"], atol=1e-4, rtol=1e-4)
    assert jnp.allclose(out_f32["density"], ref["density"], atol=1e-4, rtol=1e-4)

    # Default fast path: bf16 MXU operands with f32 accumulation (v6e/v7x native
    # MXU path); loose tolerance vs. the f32 reference.
    out = mlp_network_forward(point_features, params)
    jax.block_until_ready(out)
    assert out["color"].shape == (N, M, output_dim)
    assert out["density"].shape == (N, M, 1)
    assert jnp.allclose(out["color"], ref["color"], atol=1e-1, rtol=1e-1)
    assert jnp.allclose(out["density"], ref["density"], atol=1e-1, rtol=1e-1)

    print("KERNEL_OK")
</pallas_src>

<mosaic_0001>
module attributes {stable_mosaic.version = 11 : i64} {
  func.func @_mlp_kernel(%arg0: i32, %arg1: memref<504x32xf32, #tpu.memory_space<vmem>>, %arg2: memref<32x128xf32, #tpu.memory_space<vmem>>, %arg3: memref<1x128xf32, #tpu.memory_space<vmem>>, %arg4: memref<128x128xf32, #tpu.memory_space<vmem>>, %arg5: memref<1x128xf32, #tpu.memory_space<vmem>>, %arg6: memref<504x4xf32, #tpu.memory_space<vmem>>) attributes {dimension_semantics = [#tpu.dimension_semantics<parallel>], iteration_bounds = array<i64: 2>, scalar_prefetch = 0 : i64, scratch_operands = 0 : i64, tpu.core_type = #tpu.core_type<tc>, window_params = [{transform_indices = @transform_0, window_bounds = array<i64: 504, 32>}, {pipeline_mode = #tpu.pipeline_mode<synchronous>, transform_indices = @transform_1, window_bounds = array<i64: 32, 128>}, {pipeline_mode = #tpu.pipeline_mode<synchronous>, transform_indices = @transform_2, window_bounds = array<i64: 1, 128>}, {pipeline_mode = #tpu.pipeline_mode<synchronous>, transform_indices = @transform_3, window_bounds = array<i64: 128, 128>}, {pipeline_mode = #tpu.pipeline_mode<synchronous>, transform_indices = @transform_4, window_bounds = array<i64: 1, 128>}, {transform_indices = @transform_5, window_bounds = array<i64: 504, 4>}]} {
    %c0 = arith.constant 0 : index
    %c0_0 = arith.constant 0 : index
    %0 = vector.load %arg1[%c0, %c0_0] : memref<504x32xf32, #tpu.memory_space<vmem>>, vector<504x32xf32>
    %c0_1 = arith.constant 0 : index
    %c0_2 = arith.constant 0 : index
    %1 = vector.load %arg2[%c0_1, %c0_2] : memref<32x128xf32, #tpu.memory_space<vmem>>, vector<32x128xf32>
    %cst = arith.constant dense<0.000000e+00> : vector<504x128xf32>
    %2 = tpu.matmul %0, %1, %cst {dimension_numbers = #tpu.dot_dimension_numbers<[1], [0], [0], [1], [0, 0, 1, 1], [], []>} : vector<504x32xf32>, vector<32x128xf32>, vector<504x128xf32> -> vector<504x128xf32>
    %c0_3 = arith.constant 0 : index
    %c0_4 = arith.constant 0 : index
    %3 = vector.load %arg3[%c0_3, %c0_4] : memref<1x128xf32, #tpu.memory_space<vmem>>, vector<1x128xf32>
    %4 = vector.broadcast %3 : vector<1x128xf32> to vector<504x128xf32>
    %5 = arith.addf %2, %4 : vector<504x128xf32>
    %cst_5 = arith.constant 0.000000e+00 : f32
    %6 = vector.broadcast %cst_5 : f32 to vector<504x128xf32>
    %7 = arith.cmpf oge, %5, %6 : vector<504x128xf32>
    %cst_6 = arith.constant 2.000000e-01 : f32
    %8 = vector.broadcast %cst_6 : f32 to vector<504x128xf32>
    %9 = arith.mulf %8, %5 : vector<504x128xf32>
    %10 = arith.select %7, %5, %9 : vector<504x128xi1>, vector<504x128xf32>
    %c0_7 = arith.constant 0 : index
    %c0_8 = arith.constant 0 : index
    %11 = vector.load %arg4[%c0_7, %c0_8] : memref<128x128xf32, #tpu.memory_space<vmem>>, vector<128x128xf32>
    %cst_9 = arith.constant dense<0.000000e+00> : vector<504x128xf32>
    %12 = tpu.matmul %10, %11, %cst_9 {dimension_numbers = #tpu.dot_dimension_numbers<[1], [0], [0], [1], [0, 0, 1, 1], [], []>} : vector<504x128xf32>, vector<128x128xf32>, vector<504x128xf32> -> vector<504x128xf32>
    %c0_10 = arith.constant 0 : index
    %c0_11 = arith.constant 0 : index
    %13 = vector.load %arg5[%c0_10, %c0_11] : memref<1x128xf32, #tpu.memory_space<vmem>>, vector<1x128xf32>
    %14 = vector.broadcast %13 : vector<1x128xf32> to vector<504x128xf32>
    %15 = arith.addf %12, %14 : vector<504x128xf32>
    %16 = vector.extract_strided_slice %15 {offsets = [0, 0], sizes = [504, 4], strides = [1, 1]} : vector<504x128xf32> to vector<504x4xf32>
    %c0_12 = arith.constant 0 : index
    %c0_13 = arith.constant 0 : index
    %17 = vector.load %arg6[%c0_12, %c0_13] : memref<504x4xf32, #tpu.memory_space<vmem>>, vector<504x4xf32>
    tpu.vector_store %arg6[%c0_12, %c0_13], %16 {strides = array<i32>} : memref<504x4xf32, #tpu.memory_space<vmem>>, vector<504x4xf32>,
    return
  }
  func.func @transform_0(%arg0: i32) -> (i32, i32) {
    %c0_i32 = arith.constant 0 : i32
    %c0_i32_0 = arith.constant 0 : i32
    return %arg0, %c0_i32 : i32, i32
  }
  func.func @transform_1(%arg0: i32) -> (i32, i32) {
    %c0_i32 = arith.constant 0 : i32
    %c0_i32_0 = arith.constant 0 : i32
    %c0_i32_1 = arith.constant 0 : i32
    return %c0_i32, %c0_i32_0 : i32, i32
  }
  func.func @transform_2(%arg0: i32) -> (i32, i32) {
    %c0_i32 = arith.constant 0 : i32
    %c0_i32_0 = arith.constant 0 : i32
    %c0_i32_1 = arith.constant 0 : i32
    return %c0_i32, %c0_i32_0 : i32, i32
  }
  func.func @transform_3(%arg0: i32) -> (i32, i32) {
    %c0_i32 = arith.constant 0 : i32
    %c0_i32_0 = arith.constant 0 : i32
    %c0_i32_1 = arith.constant 0 : i32
    return %c0_i32, %c0_i32_0 : i32, i32
  }
  func.func @transform_4(%arg0: i32) -> (i32, i32) {
    %c0_i32 = arith.constant 0 : i32
    %c0_i32_0 = arith.constant 0 : i32
    %c0_i32_1 = arith.constant 0 : i32
    return %c0_i32, %c0_i32_0 : i32, i32
  }
  func.func @transform_5(%arg0: i32) -> (i32, i32) {
    %c0_i32 = arith.constant 0 : i32
    %c0_i32_0 = arith.constant 0 : i32
    return %arg0, %c0_i32 : i32, i32
  }
}

</mosaic_0001>

<llo_original>
// kernel: tpu_custom_call.1
$region0: #{tpu_custom_call.1}
  #allocation0 [shape = 'u32[]', space=smem, size = 0x4, offset = 0x4, fixed_abs, tag = 'smem constant byte address 0x4 - core index']
  #allocation1 [shape = 'u32[144,128]{1,0:T(1,128)}', space=vmem, size = 0x12000, scoped, tag = 'internal scratch']
  %s0 = inlined_call_operand.vmem [shape: f32[1000,32], index: 0, kind: input, shape index: {}]
  %s1 = inlined_call_operand.vmem [shape: f32[32,128], index: 1, kind: input, shape index: {}]
  %s2 = inlined_call_operand.vmem [shape: f32[1,128], index: 2, kind: input, shape index: {}]
  %s3 = inlined_call_operand.vmem [shape: f32[128,128], index: 3, kind: input, shape index: {}]
  %s4 = inlined_call_operand.vmem [shape: f32[1,128], index: 4, kind: input, shape index: {}]
  %s5 = inlined_call_operand.vmem [shape: f32[1000,4], index: 5, kind: output, shape index: {}]
  %s6 = sld [smem:[#allocation0]]
  $region101: #{tpu_custom_call.1} parent=0
    _
  %s8 = ssub.s32 1, %s6
  %s9 = scalar_select 0, %s8, %s6
  $region1: #{tpu_custom_call.1} parent=0
    #allocation2 [shape = 'u8[516096]{0}', space=vmem, size = 0x7e000, scoped, tag = 'output window, operand 0']
    loop: start=0, step=1, limit=4
    $region2: #{tpu_custom_call.1} parent=1 // loop_pre_header
      _
    $region3: #{tpu_custom_call.1} parent=1 // loop_header
      %s11 = sphi 0, %s15
      %p12 = scmp.ge.s32.totalorder %s11, 4
      %s21 = sphi 0, %s23
      %s24 = sphi 0, %s21
      %s25 = sphi 0, %s24
      %s41 = sphi 0, %s25
      %s45 = sphi 0, %s45
      %s47 = sphi 0, %s45
      %s48 = sphi 0, %s47
      %s62 = sphi 0, %s48
      %s66 = sphi 0, %s66
      %s68 = sphi 0, %s66
      %s69 = sphi 0, %s68
      %s83 = sphi 0, %s69
      %s87 = sphi 0, %s87
      %s89 = sphi 0, %s87
      %s90 = sphi 0, %s89
      %s104 = sphi 0, %s90
      %s108 = sphi 0, %s108
      %s110 = sphi 0, %s108
      %s111 = sphi 0, %s110
      %s125 = sphi 0, %s111
      %s131 = sphi 0, %s133
      %s134 = sphi 0, %s131
      %s135 = sphi 0, %s134
      %s151 = sphi 0, %s135
    $region4: #{tpu_custom_call.1} parent=1 // loop_header_branch
      %14 = sbr.rel (%p12) target = $region8
    $region5: #{tpu_custom_call.1} parent=1 // loop_body
      %s16 = ssub.s32 %s11, 1
      %s17 = ssub.s32 %s11, 2
      %s18 = sadd.s32 %s11, 1
      %s19 = ssub.s32 %s11, %s18
      %p20 = scmp.eq.s32.totalorder %s19, 0
      %s22 = sadd.s32 %s21, 1
      %s23 = scalar_select %p20, %s21, %s22
      %p26 = pneg %p20
      %p27 = scmp.eq.s32.totalorder %s11, 1
      %p28 = por %p26, %p27
      %p29 = scmp.ne.s32.totalorder %s21, %s24
      %p30 = scmp.eq.s32.totalorder %s11, 0
      %p31 = por %p29, %p30
      %p32 = scmp.ne.s32.totalorder %s21, %s24
      %p33 = scmp.eq.s32.totalorder %s16, 1
      %p34 = por %p32, %p33
      %p35 = scmp.ne.s32.totalorder %s24, %s25
      %p36 = scmp.eq.s32.totalorder %s16, 0
      %p37 = por %p35, %p36
      %p38 = scmp.ne.s32.totalorder %s24, %s25
      %p39 = scmp.eq.s32.totalorder %s17, 1
      %p40 = por %p38, %p39
      %p42 = scmp.ne.s32.totalorder %s25, %s41
      %p43 = scmp.eq.s32.totalorder %s17, 0
      %p44 = por %p42, %p43
      %s46 = sadd.s32 %s45, 1
      %p49 = scmp.eq.s32.totalorder %s11, 1
      %p50 = scmp.ne.s32.totalorder %s45, %s47
      %p51 = scmp.eq.s32.totalorder %s11, 0
      %p52 = por %p50, %p51
      %p53 = scmp.ne.s32.totalorder %s45, %s47
      %p54 = scmp.eq.s32.totalorder %s16, 1
      %p55 = por %p53, %p54
      %p56 = scmp.ne.s32.totalorder %s47, %s48
      %p57 = scmp.eq.s32.totalorder %s16, 0
      %p58 = por %p56, %p57
      %p59 = scmp.ne.s32.totalorder %s47, %s48
      %p60 = scmp.eq.s32.totalorder %s17, 1
      %p61 = por %p59, %p60
      %p63 = scmp.ne.s32.totalorder %s48, %s62
      %p64 = scmp.eq.s32.totalorder %s17, 0
      %p65 = por %p63, %p64
      %s67 = sadd.s32 %s66, 1
      %p70 = scmp.eq.s32.totalorder %s11, 1
      %p71 = scmp.ne.s32.totalorder %s66, %s68
      %p72 = scmp.eq.s32.totalorder %s11, 0
      %p73 = por %p71, %p72
      %p74 = scmp.ne.s32.totalorder %s66, %s68
      %p75 = scmp.eq.s32.totalorder %s16, 1
      %p76 = por %p74, %p75
      %p77 = scmp.ne.s32.totalorder %s68, %s69
      %p78 = scmp.eq.s32.totalorder %s16, 0
      %p79 = por %p77, %p78
      %p80 = scmp.ne.s32.totalorder %s68, %s69
      %p81 = scmp.eq.s32.totalorder %s17, 1
      %p82 = por %p80, %p81
      %p84 = scmp.ne.s32.totalorder %s69, %s83
      %p85 = scmp.eq.s32.totalorder %s17, 0
      %p86 = por %p84, %p85
      %s88 = sadd.s32 %s87, 1
      %p91 = scmp.eq.s32.totalorder %s11, 1
      %p92 = scmp.ne.s32.totalorder %s87, %s89
      %p93 = scmp.eq.s32.totalorder %s11, 0
      %p94 = por %p92, %p93
      %p95 = scmp.ne.s32.totalorder %s87, %s89
      %p96 = scmp.eq.s32.totalorder %s16, 1
      %p97 = por %p95, %p96
      %p98 = scmp.ne.s32.totalorder %s89, %s90
      %p99 = scmp.eq.s32.totalorder %s16, 0
      %p100 = por %p98, %p99
      %p101 = scmp.ne.s32.totalorder %s89, %s90
      %p102 = scmp.eq.s32.totalorder %s17, 1
      %p103 = por %p101, %p102
      %p105 = scmp.ne.s32.totalorder %s90, %s104
      %p106 = scmp.eq.s32.totalorder %s17, 0
      %p107 = por %p105, %p106
      %s109 = sadd.s32 %s108, 1
      %p112 = scmp.eq.s32.totalorder %s11, 1
      %p113 = scmp.ne.s32.totalorder %s108, %s110
      %p114 = scmp.eq.s32.totalorder %s11, 0
      %p115 = por %p113, %p114
      %p116 = scmp.ne.s32.totalorder %s108, %s110
      %p117 = scmp.eq.s32.totalorder %s16, 1
      %p118 = por %p116, %p117
      %p119 = scmp.ne.s32.totalorder %s110, %s111
      %p120 = scmp.eq.s32.totalorder %s16, 0
      %p121 = por %p119, %p120
      %p122 = scmp.ne.s32.totalorder %s110, %s111
      %p123 = scmp.eq.s32.totalorder %s17, 1
      %p124 = por %p122, %p123
      %p126 = scmp.ne.s32.totalorder %s111, %s125
      %p127 = scmp.eq.s32.totalorder %s17, 0
      %p128 = por %p126, %p127
      %s129 = ssub.s32 %s11, %s18
      %p130 = scmp.eq.s32.totalorder %s129, 0
      %s132 = sadd.s32 %s131, 1
      %s133 = scalar_select %p130, %s131, %s132
      %p136 = pneg %p130
      %p137 = scmp.eq.s32.totalorder %s11, 1
      %p138 = por %p136, %p137
      %p139 = scmp.ne.s32.totalorder %s131, %s134
      %p140 = scmp.eq.s32.totalorder %s11, 0
      %p141 = por %p139, %p140
      %p142 = scmp.ne.s32.totalorder %s131, %s134
      %p143 = scmp.eq.s32.totalorder %s16, 1
      %p144 = por %p142, %p143
      %p145 = scmp.ne.s32.totalorder %s134, %s135
      %p146 = scmp.eq.s32.totalorder %s16, 0
      %p147 = por %p145, %p146
      %p148 = scmp.ne.s32.totalorder %s134, %s135
      %p149 = scmp.eq.s32.totalorder %s17, 1
      %p150 = por %p148, %p149
      %p152 = scmp.ne.s32.totalorder %s135, %s151
      %p153 = scmp.eq.s32.totalorder %s17, 0
      %p154 = por %p152, %p153
      %p155 = scmp.le.s32.totalorder 1, %s11
      %p156 = scmp.lt.s32.totalorder %s11, 3
      %p157 = pnand %p155, %p156
      %p158 = pneg %p157
      // Predicated region
      $region9: #{tpu_custom_call.1} parent=5 // pred_check
        _
      $region10: #{tpu_custom_call.1} parent=5 // pred_check_branch
        %160 = sbr.rel (%p157) target = $region12
      $region11: #{tpu_custom_call.1} parent=5 // pred_region
        %s161 = ssub.s32 %s11, 1
        // Predicated region
        $region13: #{tpu_custom_call.1} parent=11 // pred_check
          %p162 = pneg %p58
        $region14: #{tpu_custom_call.1} parent=11 // pred_check_branch
          %164 = sbr.rel (%p162) target = $region16
        $region15: #{tpu_custom_call.1} parent=11 // pred_region
          _
        $region16: #{tpu_custom_call.1} parent=11 // pred_fallthru
          _
        // Predicated region
        $region17: #{tpu_custom_call.1} parent=11 // pred_check
          %p165 = pneg %p79
        $region18: #{tpu_custom_call.1} parent=11 // pred_check_branch
          %167 = sbr.rel (%p165) target = $region20
        $region19: #{tpu_custom_call.1} parent=11 // pred_region
          _
        $region20: #{tpu_custom_call.1} parent=11 // pred_fallthru
          _
        // Predicated region
        $region21: #{tpu_custom_call.1} parent=11 // pred_check
          %p168 = pneg %p100
        $region22: #{tpu_custom_call.1} parent=11 // pred_check_branch
          %170 = sbr.rel (%p168) target = $region24
        $region23: #{tpu_custom_call.1} parent=11 // pred_region
          _
        $region24: #{tpu_custom_call.1} parent=11 // pred_fallthru
          _
        // Predicated region
        $region25: #{tpu_custom_call.1} parent=11 // pred_check
          %p171 = pneg %p121
        $region26: #{tpu_custom_call.1} parent=11 // pred_check_branch
          %173 = sbr.rel (%p171) target = $region28
        $region27: #{tpu_custom_call.1} parent=11 // pred_region
          _
        $region28: #{tpu_custom_call.1} parent=11 // pred_fallthru
          _
      $region12: #{tpu_custom_call.1} parent=5 // pred_fallthru
        _
      %p174 = scmp.lt.s32.totalorder %s11, 2
      // Predicated region
      $region29: #{tpu_custom_call.1} parent=5 // pred_check
        %p175 = pneg %p174
      $region30: #{tpu_custom_call.1} parent=5 // pred_check_branch
        %177 = sbr.rel (%p175) target = $region32
      $region31: #{tpu_custom_call.1} parent=5 // pred_region
        // Predicated region
        $region33: #{tpu_custom_call.1} parent=31 // pred_check
          %p178 = pneg %p31
        $region34: #{tpu_custom_call.1} parent=31 // pred_check_branch
          %180 = sbr.rel (%p178) target = $region36
        $region35: #{tpu_custom_call.1} parent=31 // pred_region
          %s181 = smul.u32 63, %s11
          %s182 = ssub.s32 125, %s181
          %p183 = scmp.lt.s32.totalorder %s182, 63
          %s184 = scalar_select %p183, %s182, 63
          %s185 = smul.u32 128, %s184
          %p186 = scmp.lt.s32.totalorder %s181, 124
          %s187 = scalar_select %p186, %s181, 124
          %s188 = smul.addr %s187, 8
          %s189 = scalar_lea.vmem %s0, %s188
          %s190 = smul.u32 63, %s11
          %s191 = ssub.s32 125, %s190
          %p192 = scmp.lt.s32.totalorder %s191, 63
          %s193 = scalar_select %p192, %s191, 63
          %s194 = smul.u32 128, %s193
        $region36: #{tpu_custom_call.1} parent=31 // pred_fallthru
          _
      $region32: #{tpu_custom_call.1} parent=5 // pred_fallthru
        _
      %p195 = scmp.le.s32.totalorder 1, %s11
      %p196 = scmp.lt.s32.totalorder %s11, 3
      %p197 = pnand %p195, %p196
      %p198 = pneg %p197
      // Predicated region
      $region37: #{tpu_custom_call.1} parent=5 // pred_check
        _
      $region38: #{tpu_custom_call.1} parent=5 // pred_check_branch
        %200 = sbr.rel (%p197) target = $region40
      $region39: #{tpu_custom_call.1} parent=5 // pred_region
        %s201 = ssub.s32 %s11, 1
        %s202 = smul.u32 63, %s16
        %s203 = ssub.s32 125, %s202
        %p204 = scmp.lt.s32.totalorder %s203, 63
        %s205 = scalar_select %p204, %s203, 63
        %s206 = smul.u32 128, %s205
        %p207 = scmp.lt.s32.totalorder %s202, 124
        %s208 = scalar_select %p207, %s202, 124
        %s209 = smul.addr %s208, 8
        %s210 = scalar_lea.vmem %s0, %s209
        %p211 = pneg %p37
        %p212 = pneg %p34
        %p213 = pneg %p58
        %p214 = pneg %p55
        %p215 = pneg %p79
        %p216 = pneg %p76
        %p217 = pneg %p100
        %p218 = pneg %p97
        %p219 = pneg %p121
        %p220 = pneg %p118
        %p221 = pneg %p147
        %p222 = pneg %p144
        %s223 = sand.u32 %s134, 1
        %s224 = sand.u32 %s134, 1
        %s225 = smul.addr %s224, 504
        %s226 = scalar_lea.vmem [#allocation2], %s225
        %s227 = smul.u32 63, %s16
        %s228 = ssub.s32 125, %s227
        %p229 = scmp.lt.s32.totalorder %s228, 63
        %s230 = scalar_select %p229, %s228, 63
        %s231 = smul.u32 128, %s230
        %p232 = scmp.lt.s32.totalorder %s227, 124
        %s233 = scalar_select %p232, %s227, 124
        %s234 = smul.addr %s233, 8
        %s235 = scalar_lea.vmem %s0, %s234
        %s236 = smul.u32 63, %s16
        %s237 = ssub.s32 125, %s236
        %p238 = scmp.lt.s32.totalorder %s237, 63
        %s239 = scalar_select %p238, %s237, 63
        %s240 = smul.u32 128, %s239
        %s241 = smul.u32 63, %s16
        %s242 = ssub.s32 125, %s241
        %p243 = scmp.lt.s32.totalorder %s242, 63
        %s244 = scalar_select %p243, %s242, 63
        %s245 = smul.u32 128, %s244
        %v246 = vld [vmem:[%s235] sm:$0xff]
        %v247 = vld [vmem:[%s235 + $0x8] sm:$0xff]
        %v248 = vld [vmem:[%s235 + $0x10] sm:$0xff]
        %v249 = vld [vmem:[%s235 + $0x18] sm:$0xff]
        %v250 = vld [vmem:[%s235 + $0x20] sm:$0xff]
        %v251 = vld [vmem:[%s235 + $0x28] sm:$0xff]
        %v252 = vld [vmem:[%s235 + $0x30] sm:$0xff]
        %v253 = vld [vmem:[%s235 + $0x38] sm:$0xff]
        %v254 = vld [vmem:[%s235 + $0x40] sm:$0xff]
        %v255 = vld [vmem:[%s235 + $0x48] sm:$0xff]
        %v256 = vld [vmem:[%s235 + $0x50] sm:$0xff]
        %v257 = vld [vmem:[%s235 + $0x58] sm:$0xff]
        %v258 = vld [vmem:[%s235 + $0x60] sm:$0xff]
        %v259 = vld [vmem:[%s235 + $0x68] sm:$0xff]
        %v260 = vld [vmem:[%s235 + $0x70] sm:$0xff]
        %v261 = vld [vmem:[%s235 + $0x78] sm:$0xff]
        %v262 = vld [vmem:[%s235 + $0x80] sm:$0xff]
        %v263 = vld [vmem:[%s235 + $0x88] sm:$0xff]
        %v264 = vld [vmem:[%s235 + $0x90] sm:$0xff]
        %v265 = vld [vmem:[%s235 + $0x98] sm:$0xff]
        %v266 = vld [vmem:[%s235 + $0xa0] sm:$0xff]
        %v267 = vld [vmem:[%s235 + $0xa8] sm:$0xff]
        %v268 = vld [vmem:[%s235 + $0xb0] sm:$0xff]
        %v269 = vld [vmem:[%s235 + $0xb8] sm:$0xff]
        %v270 = vld [vmem:[%s235 + $0xc0] sm:$0xff]
        %v271 = vld [vmem:[%s235 + $0xc8] sm:$0xff]
        %v272 = vld [vmem:[%s235 + $0xd0] sm:$0xff]
        %v273 = vld [vmem:[%s235 + $0xd8] sm:$0xff]
        %v274 = vld [vmem:[%s235 + $0xe0] sm:$0xff]
        %v275 = vld [vmem:[%s235 + $0xe8] sm:$0xff]
        %v276 = vld [vmem:[%s235 + $0xf0] sm:$0xff]
        %v277 = vld [vmem:[%s235 + $0xf8] sm:$0xff]
        %v278 = vld [vmem:[%s235 + $0x100] sm:$0xff]
        %v279 = vld [vmem:[%s235 + $0x108] sm:$0xff]
        %v280 = vld [vmem:[%s235 + $0x110] sm:$0xff]
        %v281 = vld [vmem:[%s235 + $0x118] sm:$0xff]
        %v282 = vld [vmem:[%s235 + $0x120] sm:$0xff]
        %v283 = vld [vmem:[%s235 + $0x128] sm:$0xff]
        %v284 = vld [vmem:[%s235 + $0x130] sm:$0xff]
        %v285 = vld [vmem:[%s235 + $0x138] sm:$0xff]
        %v286 = vld [vmem:[%s235 + $0x140] sm:$0xff]
        %v287 = vld [vmem:[%s235 + $0x148] sm:$0xff]
        %v288 = vld [vmem:[%s235 + $0x150] sm:$0xff]
        %v289 = vld [vmem:[%s235 + $0x158] sm:$0xff]
        %v290 = vld [vmem:[%s235 + $0x160] sm:$0xff]
        %v291 = vld [vmem:[%s235 + $0x168] sm:$0xff]
        %v292 = vld [vmem:[%s235 + $0x170] sm:$0xff]
        %v293 = vld [vmem:[%s235 + $0x178] sm:$0xff]
        %v294 = vld [vmem:[%s235 + $0x180] sm:$0xff]
        %v295 = vld [vmem:[%s235 + $0x188] sm:$0xff]
        %v296 = vld [vmem:[%s235 + $0x190] sm:$0xff]
        %v297 = vld [vmem:[%s235 + $0x198] sm:$0xff]
        %v298 = vld [vmem:[%s235 + $0x1a0] sm:$0xff]
        %v299 = vld [vmem:[%s235 + $0x1a8] sm:$0xff]
        %v300 = vld [vmem:[%s235 + $0x1b0] sm:$0xff]
        %v301 = vld [vmem:[%s235 + $0x1b8] sm:$0xff]
        %v302 = vld [vmem:[%s235 + $0x1c0] sm:$0xff]
        %v303 = vld [vmem:[%s235 + $0x1c8] sm:$0xff]
        %v304 = vld [vmem:[%s235 + $0x1d0] sm:$0xff]
        %v305 = vld [vmem:[%s235 + $0x1d8] sm:$0xff]
        %v306 = vld [vmem:[%s235 + $0x1e0] sm:$0xff]
        %v307 = vld [vmem:[%s235 + $0x1e8] sm:$0xff]
        %v308 = vld [vmem:[%s235 + $0x1f0] sm:$0xff]
        %v309 = vld [vmem:[%s1] sm:$0xff]
        %v310 = vld [vmem:[%s1 + $0x8] sm:$0xff]
        %v311 = vld [vmem:[%s1 + $0x10] sm:$0xff]
        %v312 = vld [vmem:[%s1 + $0x18] sm:$0xff]
        %v313 = vld [vmem:[%s2] sm:$0x1]
        %v315 = vlaneseq
        %v316 = vshrl.u32 %v315, 7
        %v317 = vsub.s32 0, %v316
        %v318 = vrot.slane %v313, %v317
        %vm320 = vcmask 261120
        %v322 = vsel %vm320, %v246, 0
        %v325 = vsel %vm320, %v247, 0
        %v328 = vsel %vm320, %v248, 0
        %v331 = vsel %vm320, %v249, 0
        %v334 = vsel %vm320, %v250, 0
        %v337 = vsel %vm320, %v251, 0
        %v340 = vsel %vm320, %v252, 0
        %v343 = vsel %vm320, %v253, 0
        %v346 = vsel %vm320, %v254, 0
        %v349 = vsel %vm320, %v255, 0
        %v352 = vsel %vm320, %v256, 0
        %v355 = vsel %vm320, %v257, 0
        %v358 = vsel %vm320, %v258, 0
        %v361 = vsel %vm320, %v259, 0
        %v364 = vsel %vm320, %v260, 0
        %v367 = vsel %vm320, %v261, 0
        %v370 = vsel %vm320, %v262, 0
        %v373 = vsel %vm320, %v263, 0
        %v376 = vsel %vm320, %v264, 0
        %v379 = vsel %vm320, %v265, 0
        %v382 = vsel %vm320, %v266, 0
        %v385 = vsel %vm320, %v267, 0
        %v388 = vsel %vm320, %v268, 0
        %v391 = vsel %vm320, %v269, 0
        %v394 = vsel %vm320, %v270, 0
        %v397 = vsel %vm320, %v271, 0
        %v400 = vsel %vm320, %v272, 0
        %v403 = vsel %vm320, %v273, 0
        %v406 = vsel %vm320, %v274, 0
        %v409 = vsel %vm320, %v275, 0
        %v412 = vsel %vm320, %v276, 0
        %v415 = vsel %vm320, %v277, 0
        %v418 = vsel %vm320, %v278, 0
        %v421 = vsel %vm320, %v279, 0
        %v424 = vsel %vm320, %v280, 0
        %v427 = vsel %vm320, %v281, 0
        %v430 = vsel %vm320, %v282, 0
        %v433 = vsel %vm320, %v283, 0
        %v436 = vsel %vm320, %v284, 0
        %v439 = vsel %vm320, %v285, 0
        %v442 = vsel %vm320, %v286, 0
        %v445 = vsel %vm320, %v287, 0
        %v448 = vsel %vm320, %v288, 0
        %v451 = vsel %vm320, %v289, 0
        %v454 = vsel %vm320, %v290, 0
        %v457 = vsel %vm320, %v291, 0
        %v460 = vsel %vm320, %v292, 0
        %v463 = vsel %vm320, %v293, 0
        %v466 = vsel %vm320, %v294, 0
        %v469 = vsel %vm320, %v295, 0
        %v472 = vsel %vm320, %v296, 0
        %v475 = vsel %vm320, %v297, 0
        %v478 = vsel %vm320, %v298, 0
        %v481 = vsel %vm320, %v299, 0
        %v484 = vsel %vm320, %v300, 0
        %v487 = vsel %vm320, %v301, 0
        %v490 = vsel %vm320, %v302, 0
        %v493 = vsel %vm320, %v303, 0
        %v496 = vsel %vm320, %v304, 0
        %v499 = vsel %vm320, %v305, 0
        %v502 = vsel %vm320, %v306, 0
        %v505 = vsel %vm320, %v307, 0
        %v508 = vsel %vm320, %v308, 0
        %510 = vmatprep.subr.mxu0 0.0
        %511 = vmatpush1.msra.mxu0 %v309
        %512 = vmatprep.subr.mxu0 0.0
        %513 = vmatpush1.msra.mxu0 %v310
        %514 = vmatprep.subr.mxu0 0.0
        %515 = vmatpush1.msra.mxu0 %v311
        %516 = vmatprep.subr.mxu0 0.0
        %517 = vmatpush1.msra.mxu0 %v312
        %518 = vmatprep.subr.mxu0 0.0
        %519 = vmatpush1.msra.mxu0 0.0
        %520 = vmatprep.subr.mxu0 0.0
        %521 = vmatpush1.msra.mxu0 0.0
        %522 = vmatprep.subr.mxu0 0.0
        %523 = vmatpush1.msra.mxu0 0.0
        %524 = vmatprep.subr.mxu0 0.0
        %525 = vmatpush1.msra.mxu0 0.0
        %526 = vmatprep.subr.mxu0 0.0
        %527 = vmatpush1.msra.mxu0 0.0
        %528 = vmatprep.subr.mxu0 0.0
        %529 = vmatpush1.msra.mxu0 0.0
        %530 = vmatprep.subr.mxu0 0.0
        %531 = vmatpush1.msra.mxu0 0.0
        %532 = vmatprep.subr.mxu0 0.0
        %533 = vmatpush1.msra.mxu0 0.0
        %534 = vmatprep.subr.mxu0 0.0
        %535 = vmatpush1.msra.mxu0 0.0
        %536 = vmatprep.subr.mxu0 0.0
        %537 = vmatpush1.msra.mxu0 0.0
        %538 = vmatprep.subr.mxu0 0.0
        %539 = vmatpush1.msra.mxu0 0.0
        %540 = vmatprep.subr.mxu0 0.0
        %541 = vmatpush1.msra.mxu0 0.0
        %542 = vmatprep.subr.mxu0 0.0
        %543 = vmatpush1.msra.mxu0 0.0
        %544 = vmatprep.subr.mxu0 0.0
        %545 = vmatpush1.msra.mxu0 0.0
        %546 = vmatprep.subr.mxu0 0.0
        %547 = vmatpush1.msra.mxu0 0.0
        %548 = vmatprep.subr.mxu0 0.0
        %549 = vmatpush1.msra.mxu0 0.0
        %550 = vmatprep.subr.mxu0 0.0
        %551 = vmatpush1.msra.mxu0 0.0
        %552 = vmatprep.subr.mxu0 0.0
        %553 = vmatpush1.msra.mxu0 0.0
        %554 = vmatprep.subr.mxu0 0.0
        %555 = vmatpush1.msra.mxu0 0.0
        %556 = vmatprep.subr.mxu0 0.0
        %557 = vmatpush1.msra.mxu0 0.0
        %558 = vmatprep.subr.mxu0 0.0
        %559 = vmatpush1.msra.mxu0 0.0
        %560 = vmatprep.subr.mxu0 0.0
        %561 = vmatpush1.msra.mxu0 0.0
        %562 = vmatprep.subr.mxu0 0.0
        %563 = vmatpush1.msra.mxu0 0.0
        %564 = vmatprep.subr.mxu0 0.0
        %565 = vmatpush1.msra.mxu0 0.0
        %566 = vmatprep.subr.mxu0 0.0
        %567 = vmatpush1.msra.mxu0 0.0
        %568 = vmatprep.subr.mxu0 0.0
        %569 = vmatpush1.msra.mxu0 0.0
        %570 = vmatprep.subr.mxu0 0.0
        %571 = vmatpush1.msra.mxu0 0.0
        %572 = vmatprep.subr.mxu0 0.0
        %573 = vmatpush1.msra.mxu0 0.0
        %574 = vmatprep.mubr.f32.mxu0 0.0
        %575 = vmatmul.mubr.f32.gmra.mrb[0].mxu0 %v322
        %v576 = vpop.f32.mrb[0].mxu0
        %v577 = vadd.f32 %v318, %v576
        %v578 = vpop.f32.mrb[0].mxu0
        %579 = vmatprep.mubr.f32.mxu0 0.0
        %580 = vmatmul.mubr.f32.gmra.mrb[0].mxu0 %v325
        %v581 = vpop.f32.mrb[0].mxu0
        %v582 = vadd.f32 %v318, %v581
        %v583 = vpop.f32.mrb[0].mxu0
        %584 = vmatprep.mubr.f32.mxu0 0.0
        %585 = vmatmul.mubr.f32.gmra.mrb[0].mxu0 %v328
        %v586 = vpop.f32.mrb[0].mxu0
        %v587 = vadd.f32 %v318, %v586
        %v588 = vpop.f32.mrb[0].mxu0
        %589 = vmatprep.mubr.f32.mxu0 0.0
        %590 = vmatmul.mubr.f32.gmra.mrb[0].mxu0 %v331
        %v591 = vpop.f32.mrb[0].mxu0
        %v592 = vadd.f32 %v318, %v591
        %v593 = vpop.f32.mrb[0].mxu0
        %594 = vmatprep.mubr.f32.mxu0 0.0
        %595 = vmatmul.mubr.f32.gmra.mrb[0].mxu0 %v334
        %v596 = vpop.f32.mrb[0].mxu0
        %v597 = vadd.f32 %v318, %v596
        %v598 = vpop.f32.mrb[0].mxu0
        %599 = vmatprep.mubr.f32.mxu0 0.0
        %600 = vmatmul.mubr.f32.gmra.mrb[0].mxu0 %v337
        %v601 = vpop.f32.mrb[0].mxu0
        %v602 = vadd.f32 %v318, %v601
        %v603 = vpop.f32.mrb[0].mxu0
        %604 = vmatprep.mubr.f32.mxu0 0.0
        %605 = vmatmul.mubr.f32.gmra.mrb[0].mxu0 %v340
        %v606 = vpop.f32.mrb[0].mxu0
        %v607 = vadd.f32 %v318, %v606
        %v608 = vpop.f32.mrb[0].mxu0
        %609 = vmatprep.mubr.f32.mxu0 0.0
        %610 = vmatmul.mubr.f32.gmra.mrb[0].mxu0 %v343
        %v611 = vpop.f32.mrb[0].mxu0
        %v612 = vadd.f32 %v318, %v611
        %v613 = vpop.f32.mrb[0].mxu0
        %614 = vmatprep.mubr.f32.mxu0 0.0
        %615 = vmatmul.mubr.f32.gmra.mrb[0].mxu0 %v346
        %v616 = vpop.f32.mrb[0].mxu0
        %v617 = vadd.f32 %v318, %v616
        %v618 = vpop.f32.mrb[0].mxu0
        %619 = vmatprep.mubr.f32.mxu0 0.0
        %620 = vmatmul.mubr.f32.gmra.mrb[0].mxu0 %v349
        %v621 = vpop.f32.mrb[0].mxu0
        %v622 = vadd.f32 %v318, %v621
        %v623 = vpop.f32.mrb[0].mxu0
        %624 = vmatprep.mubr.f32.mxu0 0.0
        %625 = vmatmul.mubr.f32.gmra.mrb[0].mxu0 %v352
        %v626 = vpop.f32.mrb[0].mxu0
        %v627 = vadd.f32 %v318, %v626
        %v628 = vpop.f32.mrb[0].mxu0
        %629 = vmatprep.mubr.f32.mxu0 0.0
        %630 = vmatmul.mubr.f32.gmra.mrb[0].mxu0 %v355
        %v631 = vpop.f32.mrb[0].mxu0
        %v632 = vadd.f32 %v318, %v631
        %v633 = vpop.f32.mrb[0].mxu0
        %634 = vmatprep.mubr.f32.mxu0 0.0
        %635 = vmatmul.mubr.f32.gmra.mrb[0].mxu0 %v358
        %v636 = vpop.f32.mrb[0].mxu0
        %v637 = vadd.f32 %v318, %v636
        %v638 = vpop.f32.mrb[0].mxu0
        %639 = vmatprep.mubr.f32.mxu0 0.0
        %640 = vmatmul.mubr.f32.gmra.mrb[0].mxu0 %v361
        %v641 = vpop.f32.mrb[0].mxu0
        %v642 = vadd.f32 %v318, %v641
        %v643 = vpop.f32.mrb[0].mxu0
        %644 = vmatprep.mubr.f32.mxu0 0.0
        %645 = vmatmul.mubr.f32.gmra.mrb[0].mxu0 %v364
        %v646 = vpop.f32.mrb[0].mxu0
        %v647 = vadd.f32 %v318, %v646
        %v648 = vpop.f32.mrb[0].mxu0
        %649 = vmatprep.mubr.f32.mxu0 0.0
        %650 = vmatmul.mubr.f32.gmra.mrb[0].mxu0 %v367
        %v651 = vpop.f32.mrb[0].mxu0
        %v652 = vadd.f32 %v318, %v651
        %v653 = vpop.f32.mrb[0].mxu0
        %654 = vmatprep.mubr.f32.mxu0 0.0
        %655 = vmatmul.mubr.f32.gmra.mrb[0].mxu0 %v370
        %v656 = vpop.f32.mrb[0].mxu0
        %v657 = vadd.f32 %v318, %v656
        %v658 = vpop.f32.mrb[0].mxu0
        %659 = vmatprep.mubr.f32.mxu0 0.0
        %660 = vmatmul.mubr.f32.gmra.mrb[0].mxu0 %v373
        %v661 = vpop.f32.mrb[0].mxu0
        %v662 = vadd.f32 %v318, %v661
        %v663 = vpop.f32.mrb[0].mxu0
        %664 = vmatprep.mubr.f32.mxu0 0.0
        %665 = vmatmul.mubr.f32.gmra.mrb[0].mxu0 %v376
        %v666 = vpop.f32.mrb[0].mxu0
        %v667 = vadd.f32 %v318, %v666
        %v668 = vpop.f32.mrb[0].mxu0
        %669 = vmatprep.mubr.f32.mxu0 0.0
        %670 = vmatmul.mubr.f32.gmra.mrb[0].mxu0 %v379
        %v671 = vpop.f32.mrb[0].mxu0
        %v672 = vadd.f32 %v318, %v671
        %v673 = vpop.f32.mrb[0].mxu0
        %674 = vmatprep.mubr.f32.mxu0 0.0
        %675 = vmatmul.mubr.f32.gmra.mrb[0].mxu0 %v382
        %v676 = vpop.f32.mrb[0].mxu0
        %v677 = vadd.f32 %v318, %v676
        %v678 = vpop.f32.mrb[0].mxu0
        %679 = vmatprep.mubr.f32.mxu0 0.0
        %680 = vmatmul.mubr.f32.gmra.mrb[0].mxu0 %v385
        %v681 = vpop.f32.mrb[0].mxu0
        %v682 = vadd.f32 %v318, %v681
        %v683 = vpop.f32.mrb[0].mxu0
        %684 = vmatprep.mubr.f32.mxu0 0.0
        %685 = vmatmul.mubr.f32.gmra.mrb[0].mxu0 %v388
        %v686 = vpop.f32.mrb[0].mxu0
        %v687 = vadd.f32 %v318, %v686
        %v688 = vpop.f32.mrb[0].mxu0
        %689 = vmatprep.mubr.f32.mxu0 0.0
        %690 = vmatmul.mubr.f32.gmra.mrb[0].mxu0 %v391
        %v691 = vpop.f32.mrb[0].mxu0
        %v692 = vadd.f32 %v318, %v691
        %v693 = vpop.f32.mrb[0].mxu0
        %694 = vmatprep.mubr.f32.mxu0 0.0
        %695 = vmatmul.mubr.f32.gmra.mrb[0].mxu0 %v394
        %v696 = vpop.f32.mrb[0].mxu0
        %v697 = vadd.f32 %v318, %v696
        %v698 = vpop.f32.mrb[0].mxu0
        %699 = vmatprep.mubr.f32.mxu0 0.0
        %700 = vmatmul.mubr.f32.gmra.mrb[0].mxu0 %v397
        %v701 = vpop.f32.mrb[0].mxu0
        %v702 = vadd.f32 %v318, %v701
        %v703 = vpop.f32.mrb[0].mxu0
        %704 = vmatprep.mubr.f32.mxu0 0.0
        %705 = vmatmul.mubr.f32.gmra.mrb[0].mxu0 %v400
        %v706 = vpop.f32.mrb[0].mxu0
        %v707 = vadd.f32 %v318, %v706
        %v708 = vpop.f32.mrb[0].mxu0
        %709 = vmatprep.mubr.f32.mxu0 0.0
        %710 = vmatmul.mubr.f32.gmra.mrb[0].mxu0 %v403
        %v711 = vpop.f32.mrb[0].mxu0
        %v712 = vadd.f32 %v318, %v711
        %v713 = vpop.f32.mrb[0].mxu0
        %714 = vmatprep.mubr.f32.mxu0 0.0
        %715 = vmatmul.mubr.f32.gmra.mrb[0].mxu0 %v406
        %v716 = vpop.f32.mrb[0].mxu0
        %v717 = vadd.f32 %v318, %v716
        %v718 = vpop.f32.mrb[0].mxu0
        %719 = vmatprep.mubr.f32.mxu0 0.0
        %720 = vmatmul.mubr.f32.gmra.mrb[0].mxu0 %v409
        %v721 = vpop.f32.mrb[0].mxu0
        %v722 = vadd.f32 %v318, %v721
        %v723 = vpop.f32.mrb[0].mxu0
        %724 = vmatprep.mubr.f32.mxu0 0.0
        %725 = vmatmul.mubr.f32.gmra.mrb[0].mxu0 %v412
        %v726 = vpop.f32.mrb[0].mxu0
        %v727 = vadd.f32 %v318, %v726
        %v728 = vpop.f32.mrb[0].mxu0
        %729 = vmatprep.mubr.f32.mxu0 0.0
        %730 = vmatmul.mubr.f32.gmra.mrb[0].mxu0 %v415
        %v731 = vpop.f32.mrb[0].mxu0
        %v732 = vadd.f32 %v318, %v731
        %v733 = vpop.f32.mrb[0].mxu0
        %734 = vmatprep.mubr.f32.mxu0 0.0
        %735 = vmatmul.mubr.f32.gmra.mrb[0].mxu0 %v418
        %v736 = vpop.f32.mrb[0].mxu0
        %v737 = vadd.f32 %v318, %v736
        %v738 = vpop.f32.mrb[0].mxu0
        %739 = vmatprep.mubr.f32.mxu0 0.0
        %740 = vmatmul.mubr.f32.gmra.mrb[0].mxu0 %v421
        %v741 = vpop.f32.mrb[0].mxu0
        %v742 = vadd.f32 %v318, %v741
        %v743 = vpop.f32.mrb[0].mxu0
        %744 = vmatprep.mubr.f32.mxu0 0.0
        %745 = vmatmul.mubr.f32.gmra.mrb[0].mxu0 %v424
        %v746 = vpop.f32.mrb[0].mxu0
        %v747 = vadd.f32 %v318, %v746
        %v748 = vpop.f32.mrb[0].mxu0
        %749 = vmatprep.mubr.f32.mxu0 0.0
        %750 = vmatmul.mubr.f32.gmra.mrb[0].mxu0 %v427
        %v751 = vpop.f32.mrb[0].mxu0
        %v752 = vadd.f32 %v318, %v751
        %v753 = vpop.f32.mrb[0].mxu0
        %754 = vmatprep.mubr.f32.mxu0 0.0
        %755 = vmatmul.mubr.f32.gmra.mrb[0].mxu0 %v430
        %v756 = vpop.f32.mrb[0].mxu0
        %v757 = vadd.f32 %v318, %v756
        %v758 = vpop.f32.mrb[0].mxu0
        %759 = vmatprep.mubr.f32.mxu0 0.0
        %760 = vmatmul.mubr.f32.gmra.mrb[0].mxu0 %v433
        %v761 = vpop.f32.mrb[0].mxu0
        %v762 = vadd.f32 %v318, %v761
        %v763 = vpop.f32.mrb[0].mxu0
        %764 = vmatprep.mubr.f32.mxu0 0.0
        %765 = vmatmul.mubr.f32.gmra.mrb[0].mxu0 %v436
        %v766 = vpop.f32.mrb[0].mxu0
        %v767 = vadd.f32 %v318, %v766
        %v768 = vpop.f32.mrb[0].mxu0
        %769 = vmatprep.mubr.f32.mxu0 0.0
        %770 = vmatmul.mubr.f32.gmra.mrb[0].mxu0 %v439
        %v771 = vpop.f32.mrb[0].mxu0
        %v772 = vadd.f32 %v318, %v771
        %v773 = vpop.f32.mrb[0].mxu0
        %774 = vmatprep.mubr.f32.mxu0 0.0
        %775 = vmatmul.mubr.f32.gmra.mrb[0].mxu0 %v442
        %v776 = vpop.f32.mrb[0].mxu0
        %v777 = vadd.f32 %v318, %v776
        %v778 = vpop.f32.mrb[0].mxu0
        %779 = vmatprep.mubr.f32.mxu0 0.0
        %780 = vmatmul.mubr.f32.gmra.mrb[0].mxu0 %v445
        %v781 = vpop.f32.mrb[0].mxu0
        %v782 = vadd.f32 %v318, %v781
        %v783 = vpop.f32.mrb[0].mxu0
        %784 = vmatprep.mubr.f32.mxu0 0.0
        %785 = vmatmul.mubr.f32.gmra.mrb[0].mxu0 %v448
        %v786 = vpop.f32.mrb[0].mxu0
        %v787 = vadd.f32 %v318, %v786
        %v788 = vpop.f32.mrb[0].mxu0
        %789 = vmatprep.mubr.f32.mxu0 0.0
        %790 = vmatmul.mubr.f32.gmra.mrb[0].mxu0 %v451
        %v791 = vpop.f32.mrb[0].mxu0
        %v792 = vadd.f32 %v318, %v791
        %v793 = vpop.f32.mrb[0].mxu0
        %794 = vmatprep.mubr.f32.mxu0 0.0
        %795 = vmatmul.mubr.f32.gmra.mrb[0].mxu0 %v454
        %v796 = vpop.f32.mrb[0].mxu0
        %v797 = vadd.f32 %v318, %v796
        %v798 = vpop.f32.mrb[0].mxu0
        %799 = vmatprep.mubr.f32.mxu0 0.0
        %800 = vmatmul.mubr.f32.gmra.mrb[0].mxu0 %v457
        %v801 = vpop.f32.mrb[0].mxu0
        %v802 = vadd.f32 %v318, %v801
        %v803 = vpop.f32.mrb[0].mxu0
        %804 = vmatprep.mubr.f32.mxu0 0.0
        %805 = vmatmul.mubr.f32.gmra.mrb[0].mxu0 %v460
        %v806 = vpop.f32.mrb[0].mxu0
        %v807 = vadd.f32 %v318, %v806
        %v808 = vpop.f32.mrb[0].mxu0
        %809 = vmatprep.mubr.f32.mxu0 0.0
        %810 = vmatmul.mubr.f32.gmra.mrb[0].mxu0 %v463
        %v811 = vpop.f32.mrb[0].mxu0
        %v812 = vadd.f32 %v318, %v811
        %v813 = vpop.f32.mrb[0].mxu0
        %814 = vmatprep.mubr.f32.mxu0 0.0
        %815 = vmatmul.mubr.f32.gmra.mrb[0].mxu0 %v466
        %v816 = vpop.f32.mrb[0].mxu0
        %v817 = vadd.f32 %v318, %v816
        %v818 = vpop.f32.mrb[0].mxu0
        %819 = vmatprep.mubr.f32.mxu0 0.0
        %820 = vmatmul.mubr.f32.gmra.mrb[0].mxu0 %v469
        %v821 = vpop.f32.mrb[0].mxu0
        %v822 = vadd.f32 %v318, %v821
        %v823 = vpop.f32.mrb[0].mxu0
        %824 = vmatprep.mubr.f32.mxu0 0.0
        %825 = vmatmul.mubr.f32.gmra.mrb[0].mxu0 %v472
        %v826 = vpop.f32.mrb[0].mxu0
        %v827 = vadd.f32 %v318, %v826
        %v828 = vpop.f32.mrb[0].mxu0
        %829 = vmatprep.mubr.f32.mxu0 0.0
        %830 = vmatmul.mubr.f32.gmra.mrb[0].mxu0 %v475
        %v831 = vpop.f32.mrb[0].mxu0
        %v832 = vadd.f32 %v318, %v831
        %v833 = vpop.f32.mrb[0].mxu0
        %834 = vmatprep.mubr.f32.mxu0 0.0
        %835 = vmatmul.mubr.f32.gmra.mrb[0].mxu0 %v478
        %v836 = vpop.f32.mrb[0].mxu0
        %v837 = vadd.f32 %v318, %v836
        %v838 = vpop.f32.mrb[0].mxu0
        %839 = vmatprep.mubr.f32.mxu0 0.0
        %840 = vmatmul.mubr.f32.gmra.mrb[0].mxu0 %v481
        %v841 = vpop.f32.mrb[0].mxu0
        %v842 = vadd.f32 %v318, %v841
        %v843 = vpop.f32.mrb[0].mxu0
        %844 = vmatprep.mubr.f32.mxu0 0.0
        %845 = vmatmul.mubr.f32.gmra.mrb[0].mxu0 %v484
        %v846 = vpop.f32.mrb[0].mxu0
        %v847 = vadd.f32 %v318, %v846
        %v848 = vpop.f32.mrb[0].mxu0
        %849 = vmatprep.mubr.f32.mxu0 0.0
        %850 = vmatmul.mubr.f32.gmra.mrb[0].mxu0 %v487
        %v851 = vpop.f32.mrb[0].mxu0
        %v852 = vadd.f32 %v318, %v851
        %v853 = vpop.f32.mrb[0].mxu0
        %854 = vmatprep.mubr.f32.mxu0 0.0
        %855 = vmatmul.mubr.f32.gmra.mrb[0].mxu0 %v490
        %v856 = vpop.f32.mrb[0].mxu0
        %v857 = vadd.f32 %v318, %v856
        %v858 = vpop.f32.mrb[0].mxu0
        %859 = vmatprep.mubr.f32.mxu0 0.0
        %860 = vmatmul.mubr.f32.gmra.mrb[0].mxu0 %v493
        %v861 = vpop.f32.mrb[0].mxu0
        %v862 = vadd.f32 %v318, %v861
        %v863 = vpop.f32.mrb[0].mxu0
        %864 = vmatprep.mubr.f32.mxu0 0.0
        %865 = vmatmul.mubr.f32.gmra.mrb[0].mxu0 %v496
        %v866 = vpop.f32.mrb[0].mxu0
        %v867 = vadd.f32 %v318, %v866
        %v868 = vpop.f32.mrb[0].mxu0
        %869 = vmatprep.mubr.f32.mxu0 0.0
        %870 = vmatmul.mubr.f32.gmra.mrb[0].mxu0 %v499
        %v871 = vpop.f32.mrb[0].mxu0
        %v872 = vadd.f32 %v318, %v871
        %v873 = vpop.f32.mrb[0].mxu0
        %874 = vmatprep.mubr.f32.mxu0 0.0
        %875 = vmatmul.mubr.f32.gmra.mrb[0].mxu0 %v502
        %v876 = vpop.f32.mrb[0].mxu0
        %v877 = vadd.f32 %v318, %v876
        %v878 = vpop.f32.mrb[0].mxu0
        %879 = vmatprep.mubr.f32.mxu0 0.0
        %880 = vmatmul.mubr.f32.gmra.mrb[0].mxu0 %v505
        %v881 = vpop.f32.mrb[0].mxu0
        %v882 = vadd.f32 %v318, %v881
        %v883 = vpop.f32.mrb[0].mxu0
        %884 = vmatprep.mubr.f32.mxu0 0.0
        %885 = vmatmul.mubr.f32.gmra.mrb[0].mxu0 %v508
        %v886 = vpop.f32.mrb[0].mxu0
        %v887 = vadd.f32 %v318, %v886
        %v888 = vpop.f32.mrb[0].mxu0
        %889 = vdwg.mxu0
        %vm890 = vcmp.ge.f32.partialorder %v577, 0.0
        %vm891 = vcmp.ge.f32.partialorder %v582, 0.0
        %vm892 = vcmp.ge.f32.partialorder %v587, 0.0
        %vm893 = vcmp.ge.f32.partialorder %v592, 0.0
        %vm894 = vcmp.ge.f32.partialorder %v597, 0.0
        %vm895 = vcmp.ge.f32.partialorder %v602, 0.0
        %vm896 = vcmp.ge.f32.partialorder %v607, 0.0
        %vm897 = vcmp.ge.f32.partialorder %v612, 0.0
        %vm898 = vcmp.ge.f32.partialorder %v617, 0.0
        %vm899 = vcmp.ge.f32.partialorder %v622, 0.0
        %vm900 = vcmp.ge.f32.partialorder %v627, 0.0
        %vm901 = vcmp.ge.f32.partialorder %v632, 0.0
        %vm902 = vcmp.ge.f32.partialorder %v637, 0.0
        %vm903 = vcmp.ge.f32.partialorder %v642, 0.0
        %vm904 = vcmp.ge.f32.partialorder %v647, 0.0
        %vm905 = vcmp.ge.f32.partialorder %v652, 0.0
        %vm906 = vcmp.ge.f32.partialorder %v657, 0.0
        %vm907 = vcmp.ge.f32.partialorder %v662, 0.0
        %vm908 = vcmp.ge.f32.partialorder %v667, 0.0
        %vm909 = vcmp.ge.f32.partialorder %v672, 0.0
        %vm910 = vcmp.ge.f32.partialorder %v677, 0.0
        %vm911 = vcmp.ge.f32.partialorder %v682, 0.0
        %vm912 = vcmp.ge.f32.partialorder %v687, 0.0
        %vm913 = vcmp.ge.f32.partialorder %v692, 0.0
        %vm914 = vcmp.ge.f32.partialorder %v697, 0.0
        %vm915 = vcmp.ge.f32.partialorder %v702, 0.0
        %vm916 = vcmp.ge.f32.partialorder %v707, 0.0
        %vm917 = vcmp.ge.f32.partialorder %v712, 0.0
        %vm918 = vcmp.ge.f32.partialorder %v717, 0.0
        %vm919 = vcmp.ge.f32.partialorder %v722, 0.0
        %vm920 = vcmp.ge.f32.partialorder %v727, 0.0
        %vm921 = vcmp.ge.f32.partialorder %v732, 0.0
        %vm922 = vcmp.ge.f32.partialorder %v737, 0.0
        %vm923 = vcmp.ge.f32.partialorder %v742, 0.0
        %vm924 = vcmp.ge.f32.partialorder %v747, 0.0
        %vm925 = vcmp.ge.f32.partialorder %v752, 0.0
        %vm926 = vcmp.ge.f32.partialorder %v757, 0.0
        %vm927 = vcmp.ge.f32.partialorder %v762, 0.0
        %vm928 = vcmp.ge.f32.partialorder %v767, 0.0
        %vm929 = vcmp.ge.f32.partialorder %v772, 0.0
        %vm930 = vcmp.ge.f32.partialorder %v777, 0.0
        %vm931 = vcmp.ge.f32.partialorder %v782, 0.0
        %vm932 = vcmp.ge.f32.partialorder %v787, 0.0
        %vm933 = vcmp.ge.f32.partialorder %v792, 0.0
        %vm934 = vcmp.ge.f32.partialorder %v797, 0.0
        %vm935 = vcmp.ge.f32.partialorder %v802, 0.0
        %vm936 = vcmp.ge.f32.partialorder %v807, 0.0
        %vm937 = vcmp.ge.f32.partialorder %v812, 0.0
        %vm938 = vcmp.ge.f32.partialorder %v817, 0.0
        %vm939 = vcmp.ge.f32.partialorder %v822, 0.0
        %vm940 = vcmp.ge.f32.partialorder %v827, 0.0
        %vm941 = vcmp.ge.f32.partialorder %v832, 0.0
        %vm942 = vcmp.ge.f32.partialorder %v837, 0.0
        %vm943 = vcmp.ge.f32.partialorder %v842, 0.0
        %vm944 = vcmp.ge.f32.partialorder %v847, 0.0
        %vm945 = vcmp.ge.f32.partialorder %v852, 0.0
        %vm946 = vcmp.ge.f32.partialorder %v857, 0.0
        %vm947 = vcmp.ge.f32.partialorder %v862, 0.0
        %vm948 = vcmp.ge.f32.partialorder %v867, 0.0
        %vm949 = vcmp.ge.f32.partialorder %v872, 0.0
        %vm950 = vcmp.ge.f32.partialorder %v877, 0.0
        %vm951 = vcmp.ge.f32.partialorder %v882, 0.0
        %vm952 = vcmp.ge.f32.partialorder %v887, 0.0
        %v953 = vmul.f32 %v577, 0.2
        %v954 = vmul.f32 %v582, 0.2
        %v955 = vmul.f32 %v587, 0.2
        %v956 = vmul.f32 %v592, 0.2
        %v957 = vmul.f32 %v597, 0.2
        %v958 = vmul.f32 %v602, 0.2
        %v959 = vmul.f32 %v607, 0.2
        %v960 = vmul.f32 %v612, 0.2
        %v961 = vmul.f32 %v617, 0.2
        %v962 = vmul.f32 %v622, 0.2
        %v963 = vmul.f32 %v627, 0.2
        %v964 = vmul.f32 %v632, 0.2
        %v965 = vmul.f32 %v637, 0.2
        %v966 = vmul.f32 %v642, 0.2
        %v967 = vmul.f32 %v647, 0.2
        %v968 = vmul.f32 %v652, 0.2
        %v969 = vmul.f32 %v657, 0.2
        %v970 = vmul.f32 %v662, 0.2
        %v971 = vmul.f32 %v667, 0.2
        %v972 = vmul.f32 %v672, 0.2
        %v973 = vmul.f32 %v677, 0.2
        %v974 = vmul.f32 %v682, 0.2
        %v975 = vmul.f32 %v687, 0.2
        %v976 = vmul.f32 %v692, 0.2
        %v977 = vmul.f32 %v697, 0.2
        %v978 = vmul.f32 %v702, 0.2
        %v979 = vmul.f32 %v707, 0.2
        %v980 = vmul.f32 %v712, 0.2
        %v981 = vmul.f32 %v717, 0.2
        %v982 = vmul.f32 %v722, 0.2
        %v983 = vmul.f32 %v727, 0.2
        %v984 = vmul.f32 %v732, 0.2
        %v985 = vmul.f32 %v737, 0.2
        %v986 = vmul.f32 %v742, 0.2
        %v987 = vmul.f32 %v747, 0.2
        %v988 = vmul.f32 %v752, 0.2
        %v989 = vmul.f32 %v757, 0.2
        %v990 = vmul.f32 %v762, 0.2
        %v991 = vmul.f32 %v767, 0.2
        %v992 = vmul.f32 %v772, 0.2
        %v993 = vmul.f32 %v777, 0.2
        %v994 = vmul.f32 %v782, 0.2
        %v995 = vmul.f32 %v787, 0.2
        %v996 = vmul.f32 %v792, 0.2
        %v997 = vmul.f32 %v797, 0.2
        %v998 = vmul.f32 %v802, 0.2
        %v999 = vmul.f32 %v807, 0.2
        %v1000 = vmul.f32 %v812, 0.2
        %v1001 = vmul.f32 %v817, 0.2
        %v1002 = vmul.f32 %v822, 0.2
        %v1003 = vmul.f32 %v827, 0.2
        %v1004 = vmul.f32 %v832, 0.2
        %v1005 = vmul.f32 %v837, 0.2
        %v1006 = vmul.f32 %v842, 0.2
        %v1007 = vmul.f32 %v847, 0.2
        %v1008 = vmul.f32 %v852, 0.2
        %v1009 = vmul.f32 %v857, 0.2
        %v1010 = vmul.f32 %v862, 0.2
        %v1011 = vmul.f32 %v867, 0.2
        %v1012 = vmul.f32 %v872, 0.2
        %v1013 = vmul.f32 %v877, 0.2
        %v1014 = vmul.f32 %v882, 0.2
        %v1015 = vmul.f32 %v887, 0.2
        %v1016 = vsel %vm890, %v577, %v953
        %v1017 = vsel %vm891, %v582, %v954
        %v1018 = vsel %vm892, %v587, %v955
        %v1019 = vsel %vm893, %v592, %v956
        %v1020 = vsel %vm894, %v597, %v957
        %v1021 = vsel %vm895, %v602, %v958
        %v1022 = vsel %vm896, %v607, %v959
        %v1023 = vsel %vm897, %v612, %v960
        %v1024 = vsel %vm898, %v617, %v961
        %v1025 = vsel %vm899, %v622, %v962
        %v1026 = vsel %vm900, %v627, %v963
        %v1027 = vsel %vm901, %v632, %v964
        %v1028 = vsel %vm902, %v637, %v965
        %v1029 = vsel %vm903, %v642, %v966
        %v1030 = vsel %vm904, %v647, %v967
        %v1031 = vsel %vm905, %v652, %v968
        %v1032 = vsel %vm906, %v657, %v969
        %v1033 = vsel %vm907, %v662, %v970
        %v1034 = vsel %vm908, %v667, %v971
        %v1035 = vsel %vm909, %v672, %v972
        %v1036 = vsel %vm910, %v677, %v973
        %v1037 = vsel %vm911, %v682, %v974
        %v1038 = vsel %vm912, %v687, %v975
        %v1039 = vsel %vm913, %v692, %v976
        %v1040 = vsel %vm914, %v697, %v977
        %v1041 = vsel %vm915, %v702, %v978
        %v1042 = vsel %vm916, %v707, %v979
        %v1043 = vsel %vm917, %v712, %v980
        %v1044 = vsel %vm918, %v717, %v981
        %v1045 = vsel %vm919, %v722, %v982
        %v1046 = vsel %vm920, %v727, %v983
        %v1047 = vsel %vm921, %v732, %v984
        %v1048 = vsel %vm922, %v737, %v985
        %v1049 = vsel %vm923, %v742, %v986
        %v1050 = vsel %vm924, %v747, %v987
        %v1051 = vsel %vm925, %v752, %v988
        %v1052 = vsel %vm926, %v757, %v989
        %v1053 = vsel %vm927, %v762, %v990
        %v1054 = vsel %vm928, %v767, %v991
        %v1055 = vsel %vm929, %v772, %v992
        %v1056 = vsel %vm930, %v777, %v993
        %v1057 = vsel %vm931, %v782, %v994
        %v1058 = vsel %vm932, %v787, %v995
        %v1059 = vsel %vm933, %v792, %v996
        %v1060 = vsel %vm934, %v797, %v997
        %v1061 = vsel %vm935, %v802, %v998
        %v1062 = vsel %vm936, %v807, %v999
        %v1063 = vsel %vm937, %v812, %v1000
        %v1064 = vsel %vm938, %v817, %v1001
        %v1065 = vsel %vm939, %v822, %v1002
        %v1066 = vsel %vm940, %v827, %v1003
        %v1067 = vsel %vm941, %v832, %v1004
        %v1068 = vsel %vm942, %v837, %v1005
        %v1069 = vsel %vm943, %v842, %v1006
        %v1070 = vsel %vm944, %v847, %v1007
        %v1071 = vsel %vm945, %v852, %v1008
        %v1072 = vsel %vm946, %v857, %v1009
        %v1073 = vsel %vm947, %v862, %v1010
        %v1074 = vsel %vm948, %v867, %v1011
        %v1075 = vsel %vm949, %v872, %v1012
        %v1076 = vsel %vm950, %v877, %v1013
        %v1077 = vsel %vm951, %v882, %v1014
        %v1078 = vsel %vm952, %v887, %v1015
        %v1079 = vld [vmem:[%s3] sm:$0xff]
        %v1080 = vld [vmem:[%s3 + $0x8] sm:$0xff]
        %v1081 = vld [vmem:[%s3 + $0x10] sm:$0xff]
        %v1082 = vld [vmem:[%s3 + $0x18] sm:$0xff]
        %v1083 = vld [vmem:[%s3 + $0x20] sm:$0xff]
        %v1084 = vld [vmem:[%s3 + $0x28] sm:$0xff]
        %v1085 = vld [vmem:[%s3 + $0x30] sm:$0xff]
        %v1086 = vld [vmem:[%s3 + $0x38] sm:$0xff]
        %v1087 = vld [vmem:[%s3 + $0x40] sm:$0xff]
        %v1088 = vld [vmem:[%s3 + $0x48] sm:$0xff]
        %v1089 = vld [vmem:[%s3 + $0x50] sm:$0xff]
        %v1090 = vld [vmem:[%s3 + $0x58] sm:$0xff]
        %v1091 = vld [vmem:[%s3 + $0x60] sm:$0xff]
        %v1092 = vld [vmem:[%s3 + $0x68] sm:$0xff]
        %v1093 = vld [vmem:[%s3 + $0x70] sm:$0xff]
        %v1094 = vld [vmem:[%s3 + $0x78] sm:$0xff]
        %v1095 = vld [vmem:[%s4] sm:$0x1]
        %v1097 = vlaneseq
        %v1098 = vshrl.u32 %v1097, 7
        %v1099 = vsub.s32 0, %v1098
        %v1100 = vrot.slane %v1095, %v1099
        %1102 = vmatprep.subr.mxu0 0.0
        %1103 = vmatpush1.msra.mxu0 %v1079
        %1104 = vmatprep.subr.mxu0 0.0
        %1105 = vmatpush1.msra.mxu0 %v1080
        %1106 = vmatprep.subr.mxu0 0.0
        %1107 = vmatpush1.msra.mxu0 %v1081
        %1108 = vmatprep.subr.mxu0 0.0
        %1109 = vmatpush1.msra.mxu0 %v1082
        %1110 = vmatprep.subr.mxu0 0.0
        %1111 = vmatpush1.msra.mxu0 %v1083
        %1112 = vmatprep.subr.mxu0 0.0
        %1113 = vmatpush1.msra.mxu0 %v1084
        %1114 = vmatprep.subr.mxu0 0.0
        %1115 = vmatpush1.msra.mxu0 %v1085
        %1116 = vmatprep.subr.mxu0 0.0
        %1117 = vmatpush1.msra.mxu0 %v1086
        %1118 = vmatprep.subr.mxu0 0.0
        %1119 = vmatpush1.msra.mxu0 %v1087
        %1120 = vmatprep.subr.mxu0 0.0
        %1121 = vmatpush1.msra.mxu0 %v1088
        %1122 = vmatprep.subr.mxu0 0.0
        %1123 = vmatpush1.msra.mxu0 %v1089
        %1124 = vmatprep.subr.mxu0 0.0
        %1125 = vmatpush1.msra.mxu0 %v1090
        %1126 = vmatprep.subr.mxu0 0.0
        %1127 = vmatpush1.msra.mxu0 %v1091
        %1128 = vmatprep.subr.mxu0 0.0
        %1129 = vmatpush1.msra.mxu0 %v1092
        %1130 = vmatprep.subr.mxu0 0.0
        %1131 = vmatpush1.msra.mxu0 %v1093
        %1132 = vmatprep.subr.mxu0 0.0
        %1133 = vmatpush1.msra.mxu0 %v1094
        %1134 = vmatprep.subr.mxu0 0.0
        %1135 = vmatpush1.msra.mxu0 0.0
        %1136 = vmatprep.subr.mxu0 0.0
        %1137 = vmatpush1.msra.mxu0 0.0
        %1138 = vmatprep.subr.mxu0 0.0
        %1139 = vmatpush1.msra.mxu0 0.0
        %1140 = vmatprep.subr.mxu0 0.0
        %1141 = vmatpush1.msra.mxu0 0.0
        %1142 = vmatprep.subr.mxu0 0.0
        %1143 = vmatpush1.msra.mxu0 0.0
        %1144 = vmatprep.subr.mxu0 0.0
        %1145 = vmatpush1.msra.mxu0 0.0
        %1146 = vmatprep.subr.mxu0 0.0
        %1147 = vmatpush1.msra.mxu0 0.0
        %1148 = vmatprep.subr.mxu0 0.0
        %1149 = vmatpush1.msra.mxu0 0.0
        %1150 = vmatprep.subr.mxu0 0.0
        %1151 = vmatpush1.msra.mxu0 0.0
        %1152 = vmatprep.subr.mxu0 0.0
        %1153 = vmatpush1.msra.mxu0 0.0
        %1154 = vmatprep.subr.mxu0 0.0
        %1155 = vmatpush1.msra.mxu0 0.0
        %1156 = vmatprep.subr.mxu0 0.0
        %1157 = vmatpush1.msra.mxu0 0.0
        %1158 = vmatprep.subr.mxu0 0.0
        %1159 = vmatpush1.msra.mxu0 0.0
        %1160 = vmatprep.subr.mxu0 0.0
        %1161 = vmatpush1.msra.mxu0 0.0
        %1162 = vmatprep.subr.mxu0 0.0
        %1163 = vmatpush1.msra.mxu0 0.0
        %1164 = vmatprep.subr.mxu0 0.0
        %1165 = vmatpush1.msra.mxu0 0.0
        %1166 = vmatprep.mubr.f32.mxu0 0.0
        %1167 = vmatmul.mubr.f32.gmra.mrb[0].mxu0 %v1016
        %v1168 = vpop.f32.mrb[0].mxu0
        %v1169 = vadd.f32 %v1100, %v1168
        %v1170 = vpop.f32.mrb[0].mxu0
        %1171 = vmatprep.mubr.f32.mxu0 0.0
        %1172 = vmatmul.mubr.f32.gmra.mrb[0].mxu0 %v1017
        %v1173 = vpop.f32.mrb[0].mxu0
        %v1174 = vadd.f32 %v1100, %v1173
        %v1175 = vpop.f32.mrb[0].mxu0
        %1176 = vmatprep.mubr.f32.mxu0 0.0
        %1177 = vmatmul.mubr.f32.gmra.mrb[0].mxu0 %v1018
        %v1178 = vpop.f32.mrb[0].mxu0
        %v1179 = vadd.f32 %v1100, %v1178
        %v1180 = vpop.f32.mrb[0].mxu0
        %1181 = vmatprep.mubr.f32.mxu0 0.0
        %1182 = vmatmul.mubr.f32.gmra.mrb[0].mxu0 %v1019
        %v1183 = vpop.f32.mrb[0].mxu0
        %v1184 = vadd.f32 %v1100, %v1183
        %v1185 = vpop.f32.mrb[0].mxu0
        %1186 = vmatprep.mubr.f32.mxu0 0.0
        %1187 = vmatmul.mubr.f32.gmra.mrb[0].mxu0 %v1020
        %v1188 = vpop.f32.mrb[0].mxu0
        %v1189 = vadd.f32 %v1100, %v1188
        %v1190 = vpop.f32.mrb[0].mxu0
        %1191 = vmatprep.mubr.f32.mxu0 0.0
        %1192 = vmatmul.mubr.f32.gmra.mrb[0].mxu0 %v1021
        %v1193 = vpop.f32.mrb[0].mxu0
        %v1194 = vadd.f32 %v1100, %v1193
        %v1195 = vpop.f32.mrb[0].mxu0
        %1196 = vmatprep.mubr.f32.mxu0 0.0
        %1197 = vmatmul.mubr.f32.gmra.mrb[0].mxu0 %v1022
        %v1198 = vpop.f32.mrb[0].mxu0
        %v1199 = vadd.f32 %v1100, %v1198
        %v1200 = vpop.f32.mrb[0].mxu0
        %1201 = vmatprep.mubr.f32.mxu0 0.0
        %1202 = vmatmul.mubr.f32.gmra.mrb[0].mxu0 %v1023
        %v1203 = vpop.f32.mrb[0].mxu0
        %v1204 = vadd.f32 %v1100, %v1203
        %v1205 = vpop.f32.mrb[0].mxu0
        %1206 = vmatprep.mubr.f32.mxu0 0.0
        %1207 = vmatmul.mubr.f32.gmra.mrb[0].mxu0 %v1024
        %v1208 = vpop.f32.mrb[0].mxu0
        %v1209 = vadd.f32 %v1100, %v1208
        %v1210 = vpop.f32.mrb[0].mxu0
        %1211 = vmatprep.mubr.f32.mxu0 0.0
        %1212 = vmatmul.mubr.f32.gmra.mrb[0].mxu0 %v1025
        %v1213 = vpop.f32.mrb[0].mxu0
        %v1214 = vadd.f32 %v1100, %v1213
        %v1215 = vpop.f32.mrb[0].mxu0
        %1216 = vmatprep.mubr.f32.mxu0 0.0
        %1217 = vmatmul.mubr.f32.gmra.mrb[0].mxu0 %v1026
        %v1218 = vpop.f32.mrb[0].mxu0
        %v1219 = vadd.f32 %v1100, %v1218
        %v1220 = vpop.f32.mrb[0].mxu0
        %1221 = vmatprep.mubr.f32.mxu0 0.0
        %1222 = vmatmul.mubr.f32.gmra.mrb[0].mxu0 %v1027
        %v1223 = vpop.f32.mrb[0].mxu0
        %v1224 = vadd.f32 %v1100, %v1223
        %v1225 = vpop.f32.mrb[0].mxu0
        %1226 = vmatprep.mubr.f32.mxu0 0.0
        %1227 = vmatmul.mubr.f32.gmra.mrb[0].mxu0 %v1028
        %v1228 = vpop.f32.mrb[0].mxu0
        %v1229 = vadd.f32 %v1100, %v1228
        %v1230 = vpop.f32.mrb[0].mxu0
        %1231 = vmatprep.mubr.f32.mxu0 0.0
        %1232 = vmatmul.mubr.f32.gmra.mrb[0].mxu0 %v1029
        %v1233 = vpop.f32.mrb[0].mxu0
        %v1234 = vadd.f32 %v1100, %v1233
        %v1235 = vpop.f32.mrb[0].mxu0
        %1236 = vmatprep.mubr.f32.mxu0 0.0
        %1237 = vmatmul.mubr.f32.gmra.mrb[0].mxu0 %v1030
        %v1238 = vpop.f32.mrb[0].mxu0
        %v1239 = vadd.f32 %v1100, %v1238
        %v1240 = vpop.f32.mrb[0].mxu0
        %1241 = vmatprep.mubr.f32.mxu0 0.0
        %1242 = vmatmul.mubr.f32.gmra.mrb[0].mxu0 %v1031
        %v1243 = vpop.f32.mrb[0].mxu0
        %v1244 = vadd.f32 %v1100, %v1243
        %v1245 = vpop.f32.mrb[0].mxu0
        %1246 = vmatprep.mubr.f32.mxu0 0.0
        %1247 = vmatmul.mubr.f32.gmra.mrb[0].mxu0 %v1032
        %v1248 = vpop.f32.mrb[0].mxu0
        %v1249 = vadd.f32 %v1100, %v1248
        %v1250 = vpop.f32.mrb[0].mxu0
        %1251 = vmatprep.mubr.f32.mxu0 0.0
        %1252 = vmatmul.mubr.f32.gmra.mrb[0].mxu0 %v1033
        %v1253 = vpop.f32.mrb[0].mxu0
        %v1254 = vadd.f32 %v1100, %v1253
        %v1255 = vpop.f32.mrb[0].mxu0
        %1256 = vmatprep.mubr.f32.mxu0 0.0
        %1257 = vmatmul.mubr.f32.gmra.mrb[0].mxu0 %v1034
        %v1258 = vpop.f32.mrb[0].mxu0
        %v1259 = vadd.f32 %v1100, %v1258
        %v1260 = vpop.f32.mrb[0].mxu0
        %1261 = vmatprep.mubr.f32.mxu0 0.0
        %1262 = vmatmul.mubr.f32.gmra.mrb[0].mxu0 %v1035
        %v1263 = vpop.f32.mrb[0].mxu0
        %v1264 = vadd.f32 %v1100, %v1263
        %v1265 = vpop.f32.mrb[0].mxu0
        %1266 = vmatprep.mubr.f32.mxu0 0.0
        %1267 = vmatmul.mubr.f32.gmra.mrb[0].mxu0 %v1036
        %v1268 = vpop.f32.mrb[0].mxu0
        %v1269 = vadd.f32 %v1100, %v1268
        %v1270 = vpop.f32.mrb[0].mxu0
        %1271 = vmatprep.mubr.f32.mxu0 0.0
        %1272 = vmatmul.mubr.f32.gmra.mrb[0].mxu0 %v1037
        %v1273 = vpop.f32.mrb[0].mxu0
        %v1274 = vadd.f32 %v1100, %v1273
        %v1275 = vpop.f32.mrb[0].mxu0
        %1276 = vmatprep.mubr.f32.mxu0 0.0
        %1277 = vmatmul.mubr.f32.gmra.mrb[0].mxu0 %v1038
        %v1278 = vpop.f32.mrb[0].mxu0
        %v1279 = vadd.f32 %v1100, %v1278
        %v1280 = vpop.f32.mrb[0].mxu0
        %1281 = vmatprep.mubr.f32.mxu0 0.0
        %1282 = vmatmul.mubr.f32.gmra.mrb[0].mxu0 %v1039
        %v1283 = vpop.f32.mrb[0].mxu0
        %v1284 = vadd.f32 %v1100, %v1283
        %v1285 = vpop.f32.mrb[0].mxu0
        %1286 = vmatprep.mubr.f32.mxu0 0.0
        %1287 = vmatmul.mubr.f32.gmra.mrb[0].mxu0 %v1040
        %v1288 = vpop.f32.mrb[0].mxu0
        %v1289 = vadd.f32 %v1100, %v1288
        %v1290 = vpop.f32.mrb[0].mxu0
        %1291 = vmatprep.mubr.f32.mxu0 0.0
        %1292 = vmatmul.mubr.f32.gmra.mrb[0].mxu0 %v1041
        %v1293 = vpop.f32.mrb[0].mxu0
        %v1294 = vadd.f32 %v1100, %v1293
        %v1295 = vpop.f32.mrb[0].mxu0
        %1296 = vmatprep.mubr.f32.mxu0 0.0
        %1297 = vmatmul.mubr.f32.gmra.mrb[0].mxu0 %v1042
        %v1298 = vpop.f32.mrb[0].mxu0
        %v1299 = vadd.f32 %v1100, %v1298
        %v1300 = vpop.f32.mrb[0].mxu0
        %1301 = vmatprep.mubr.f32.mxu0 0.0
        %1302 = vmatmul.mubr.f32.gmra.mrb[0].mxu0 %v1043
        %v1303 = vpop.f32.mrb[0].mxu0
        %v1304 = vadd.f32 %v1100, %v1303
        %v1305 = vpop.f32.mrb[0].mxu0
        %1306 = vmatprep.mubr.f32.mxu0 0.0
        %1307 = vmatmul.mubr.f32.gmra.mrb[0].mxu0 %v1044
        %v1308 = vpop.f32.mrb[0].mxu0
        %v1309 = vadd.f32 %v1100, %v1308
        %v1310 = vpop.f32.mrb[0].mxu0
        %1311 = vmatprep.mubr.f32.mxu0 0.0
        %1312 = vmatmul.mubr.f32.gmra.mrb[0].mxu0 %v1045
        %v1313 = vpop.f32.mrb[0].mxu0
        %v1314 = vadd.f32 %v1100, %v1313
        %v1315 = vpop.f32.mrb[0].mxu0
        %1316 = vmatprep.mubr.f32.mxu0 0.0
        %1317 = vmatmul.mubr.f32.gmra.mrb[0].mxu0 %v1046
        %v1318 = vpop.f32.mrb[0].mxu0
        %v1319 = vadd.f32 %v1100, %v1318
        %v1320 = vpop.f32.mrb[0].mxu0
        %1321 = vmatprep.mubr.f32.mxu0 0.0
        %1322 = vmatmul.mubr.f32.gmra.mrb[0].mxu0 %v1047
        %v1323 = vpop.f32.mrb[0].mxu0
        %v1324 = vadd.f32 %v1100, %v1323
        %v1325 = vpop.f32.mrb[0].mxu0
        %1326 = vmatprep.mubr.f32.mxu0 0.0
        %1327 = vmatmul.mubr.f32.gmra.mrb[0].mxu0 %v1048
        %v1328 = vpop.f32.mrb[0].mxu0
        %v1329 = vadd.f32 %v1100, %v1328
        %v1330 = vpop.f32.mrb[0].mxu0
        %1331 = vmatprep.mubr.f32.mxu0 0.0
        %1332 = vmatmul.mubr.f32.gmra.mrb[0].mxu0 %v1049
        %v1333 = vpop.f32.mrb[0].mxu0
        %v1334 = vadd.f32 %v1100, %v1333
        %v1335 = vpop.f32.mrb[0].mxu0
        %1336 = vmatprep.mubr.f32.mxu0 0.0
        %1337 = vmatmul.mubr.f32.gmra.mrb[0].mxu0 %v1050
        %v1338 = vpop.f32.mrb[0].mxu0
        %v1339 = vadd.f32 %v1100, %v1338
        %v1340 = vpop.f32.mrb[0].mxu0
        %1341 = vmatprep.mubr.f32.mxu0 0.0
        %1342 = vmatmul.mubr.f32.gmra.mrb[0].mxu0 %v1051
        %v1343 = vpop.f32.mrb[0].mxu0
        %v1344 = vadd.f32 %v1100, %v1343
        %v1345 = vpop.f32.mrb[0].mxu0
        %1346 = vmatprep.mubr.f32.mxu0 0.0
        %1347 = vmatmul.mubr.f32.gmra.mrb[0].mxu0 %v1052
        %v1348 = vpop.f32.mrb[0].mxu0
        %v1349 = vadd.f32 %v1100, %v1348
        %v1350 = vpop.f32.mrb[0].mxu0
        %1351 = vmatprep.mubr.f32.mxu0 0.0
        %1352 = vmatmul.mubr.f32.gmra.mrb[0].mxu0 %v1053
        %v1353 = vpop.f32.mrb[0].mxu0
        %v1354 = vadd.f32 %v1100, %v1353
        %v1355 = vpop.f32.mrb[0].mxu0
        %1356 = vmatprep.mubr.f32.mxu0 0.0
        %1357 = vmatmul.mubr.f32.gmra.mrb[0].mxu0 %v1054
        %v1358 = vpop.f32.mrb[0].mxu0
        %v1359 = vadd.f32 %v1100, %v1358
        %v1360 = vpop.f32.mrb[0].mxu0
        %1361 = vmatprep.mubr.f32.mxu0 0.0
        %1362 = vmatmul.mubr.f32.gmra.mrb[0].mxu0 %v1055
        %v1363 = vpop.f32.mrb[0].mxu0
        %v1364 = vadd.f32 %v1100, %v1363
        %v1365 = vpop.f32.mrb[0].mxu0
        %1366 = vmatprep.mubr.f32.mxu0 0.0
        %1367 = vmatmul.mubr.f32.gmra.mrb[0].mxu0 %v1056
        %v1368 = vpop.f32.mrb[0].mxu0
        %v1369 = vadd.f32 %v1100, %v1368
        %v1370 = vpop.f32.mrb[0].mxu0
        %1371 = vmatprep.mubr.f32.mxu0 0.0
        %1372 = vmatmul.mubr.f32.gmra.mrb[0].mxu0 %v1057
        %v1373 = vpop.f32.mrb[0].mxu0
        %v1374 = vadd.f32 %v1100, %v1373
        %v1375 = vpop.f32.mrb[0].mxu0
        %1376 = vmatprep.mubr.f32.mxu0 0.0
        %1377 = vmatmul.mubr.f32.gmra.mrb[0].mxu0 %v1058
        %v1378 = vpop.f32.mrb[0].mxu0
        %v1379 = vadd.f32 %v1100, %v1378
        %v1380 = vpop.f32.mrb[0].mxu0
        %1381 = vmatprep.mubr.f32.mxu0 0.0
        %1382 = vmatmul.mubr.f32.gmra.mrb[0].mxu0 %v1059
        %v1383 = vpop.f32.mrb[0].mxu0
        %v1384 = vadd.f32 %v1100, %v1383
        %v1385 = vpop.f32.mrb[0].mxu0
        %1386 = vmatprep.mubr.f32.mxu0 0.0
        %1387 = vmatmul.mubr.f32.gmra.mrb[0].mxu0 %v1060
        %v1388 = vpop.f32.mrb[0].mxu0
        %v1389 = vadd.f32 %v1100, %v1388
        %v1390 = vpop.f32.mrb[0].mxu0
        %1391 = vmatprep.mubr.f32.mxu0 0.0
        %1392 = vmatmul.mubr.f32.gmra.mrb[0].mxu0 %v1061
        %v1393 = vpop.f32.mrb[0].mxu0
        %v1394 = vadd.f32 %v1100, %v1393
        %v1395 = vpop.f32.mrb[0].mxu0
        %1396 = vmatprep.mubr.f32.mxu0 0.0
        %1397 = vmatmul.mubr.f32.gmra.mrb[0].mxu0 %v1062
        %v1398 = vpop.f32.mrb[0].mxu0
        %v1399 = vadd.f32 %v1100, %v1398
        %v1400 = vpop.f32.mrb[0].mxu0
        %1401 = vmatprep.mubr.f32.mxu0 0.0
        %1402 = vmatmul.mubr.f32.gmra.mrb[0].mxu0 %v1063
        %v1403 = vpop.f32.mrb[0].mxu0
        %v1404 = vadd.f32 %v1100, %v1403
        %v1405 = vpop.f32.mrb[0].mxu0
        %1406 = vmatprep.mubr.f32.mxu0 0.0
        %1407 = vmatmul.mubr.f32.gmra.mrb[0].mxu0 %v1064
        %v1408 = vpop.f32.mrb[0].mxu0
        %v1409 = vadd.f32 %v1100, %v1408
        %v1410 = vpop.f32.mrb[0].mxu0
        %1411 = vmatprep.mubr.f32.mxu0 0.0
        %1412 = vmatmul.mubr.f32.gmra.mrb[0].mxu0 %v1065
        %v1413 = vpop.f32.mrb[0].mxu0
        %v1414 = vadd.f32 %v1100, %v1413
        %v1415 = vpop.f32.mrb[0].mxu0
        %1416 = vmatprep.mubr.f32.mxu0 0.0
        %1417 = vmatmul.mubr.f32.gmra.mrb[0].mxu0 %v1066
        %v1418 = vpop.f32.mrb[0].mxu0
        %v1419 = vadd.f32 %v1100, %v1418
        %v1420 = vpop.f32.mrb[0].mxu0
        %1421 = vmatprep.mubr.f32.mxu0 0.0
        %1422 = vmatmul.mubr.f32.gmra.mrb[0].mxu0 %v1067
        %v1423 = vpop.f32.mrb[0].mxu0
        %v1424 = vadd.f32 %v1100, %v1423
        %v1425 = vpop.f32.mrb[0].mxu0
        %1426 = vmatprep.mubr.f32.mxu0 0.0
        %1427 = vmatmul.mubr.f32.gmra.mrb[0].mxu0 %v1068
        %v1428 = vpop.f32.mrb[0].mxu0
        %v1429 = vadd.f32 %v1100, %v1428
        %v1430 = vpop.f32.mrb[0].mxu0
        %1431 = vmatprep.mubr.f32.mxu0 0.0
        %1432 = vmatmul.mubr.f32.gmra.mrb[0].mxu0 %v1069
        %v1433 = vpop.f32.mrb[0].mxu0
        %v1434 = vadd.f32 %v1100, %v1433
        %v1435 = vpop.f32.mrb[0].mxu0
        %1436 = vmatprep.mubr.f32.mxu0 0.0
        %1437 = vmatmul.mubr.f32.gmra.mrb[0].mxu0 %v1070
        %v1438 = vpop.f32.mrb[0].mxu0
        %v1439 = vadd.f32 %v1100, %v1438
        %v1440 = vpop.f32.mrb[0].mxu0
        %1441 = vmatprep.mubr.f32.mxu0 0.0
        %1442 = vmatmul.mubr.f32.gmra.mrb[0].mxu0 %v1071
        %v1443 = vpop.f32.mrb[0].mxu0
        %v1444 = vadd.f32 %v1100, %v1443
        %v1445 = vpop.f32.mrb[0].mxu0
        %1446 = vmatprep.mubr.f32.mxu0 0.0
        %1447 = vmatmul.mubr.f32.gmra.mrb[0].mxu0 %v1072
        %v1448 = vpop.f32.mrb[0].mxu0
        %v1449 = vadd.f32 %v1100, %v1448
        %v1450 = vpop.f32.mrb[0].mxu0
        %1451 = vmatprep.mubr.f32.mxu0 0.0
        %1452 = vmatmul.mubr.f32.gmra.mrb[0].mxu0 %v1073
        %v1453 = vpop.f32.mrb[0].mxu0
        %v1454 = vadd.f32 %v1100, %v1453
        %v1455 = vpop.f32.mrb[0].mxu0
        %1456 = vmatprep.mubr.f32.mxu0 0.0
        %1457 = vmatmul.mubr.f32.gmra.mrb[0].mxu0 %v1074
        %v1458 = vpop.f32.mrb[0].mxu0
        %v1459 = vadd.f32 %v1100, %v1458
        %v1460 = vpop.f32.mrb[0].mxu0
        %1461 = vmatprep.mubr.f32.mxu0 0.0
        %1462 = vmatmul.mubr.f32.gmra.mrb[0].mxu0 %v1075
        %v1463 = vpop.f32.mrb[0].mxu0
        %v1464 = vadd.f32 %v1100, %v1463
        %v1465 = vpop.f32.mrb[0].mxu0
        %1466 = vmatprep.mubr.f32.mxu0 0.0
        %1467 = vmatmul.mubr.f32.gmra.mrb[0].mxu0 %v1076
        %v1468 = vpop.f32.mrb[0].mxu0
        %v1469 = vadd.f32 %v1100, %v1468
        %v1470 = vpop.f32.mrb[0].mxu0
        %1471 = vmatprep.mubr.f32.mxu0 0.0
        %1472 = vmatmul.mubr.f32.gmra.mrb[0].mxu0 %v1077
        %v1473 = vpop.f32.mrb[0].mxu0
        %v1474 = vadd.f32 %v1100, %v1473
        %v1475 = vpop.f32.mrb[0].mxu0
        %1476 = vmatprep.mubr.f32.mxu0 0.0
        %1477 = vmatmul.mubr.f32.gmra.mrb[0].mxu0 %v1078
        %v1478 = vpop.f32.mrb[0].mxu0
        %v1479 = vadd.f32 %v1100, %v1478
        %v1480 = vpop.f32.mrb[0].mxu0
        %1481 = vdwg.mxu0
        %vm1482 = vcmask 31744
        %1483 = vst.msk [vmem:[%s226] sm:$0xff] %vm1482, %v1169
        %1484 = vst.msk [vmem:[%s226 + $0x8] sm:$0xff] %vm1482, %v1174
        %1485 = vst.msk [vmem:[%s226 + $0x10] sm:$0xff] %vm1482, %v1179
        %1486 = vst.msk [vmem:[%s226 + $0x18] sm:$0xff] %vm1482, %v1184
        %1487 = vst.msk [vmem:[%s226 + $0x20] sm:$0xff] %vm1482, %v1189
        %1488 = vst.msk [vmem:[%s226 + $0x28] sm:$0xff] %vm1482, %v1194
        %1489 = vst.msk [vmem:[%s226 + $0x30] sm:$0xff] %vm1482, %v1199
        %1490 = vst.msk [vmem:[%s226 + $0x38] sm:$0xff] %vm1482, %v1204
        %1491 = vst.msk [vmem:[%s226 + $0x40] sm:$0xff] %vm1482, %v1209
        %1492 = vst.msk [vmem:[%s226 + $0x48] sm:$0xff] %vm1482, %v1214
        %1493 = vst.msk [vmem:[%s226 + $0x50] sm:$0xff] %vm1482, %v1219
        %1494 = vst.msk [vmem:[%s226 + $0x58] sm:$0xff] %vm1482, %v1224
        %1495 = vst.msk [vmem:[%s226 + $0x60] sm:$0xff] %vm1482, %v1229
        %1496 = vst.msk [vmem:[%s226 + $0x68] sm:$0xff] %vm1482, %v1234
        %1497 = vst.msk [vmem:[%s226 + $0x70] sm:$0xff] %vm1482, %v1239
        %1498 = vst.msk [vmem:[%s226 + $0x78] sm:$0xff] %vm1482, %v1244
        %1499 = vst.msk [vmem:[%s226 + $0x80] sm:$0xff] %vm1482, %v1249
        %1500 = vst.msk [vmem:[%s226 + $0x88] sm:$0xff] %vm1482, %v1254
        %1501 = vst.msk [vmem:[%s226 + $0x90] sm:$0xff] %vm1482, %v1259
        %1502 = vst.msk [vmem:[%s226 + $0x98] sm:$0xff] %vm1482, %v1264
        %1503 = vst.msk [vmem:[%s226 + $0xa0] sm:$0xff] %vm1482, %v1269
        %1504 = vst.msk [vmem:[%s226 + $0xa8] sm:$0xff] %vm1482, %v1274
        %1505 = vst.msk [vmem:[%s226 + $0xb0] sm:$0xff] %vm1482, %v1279
        %1506 = vst.msk [vmem:[%s226 + $0xb8] sm:$0xff] %vm1482, %v1284
        %1507 = vst.msk [vmem:[%s226 + $0xc0] sm:$0xff] %vm1482, %v1289
        %1508 = vst.msk [vmem:[%s226 + $0xc8] sm:$0xff] %vm1482, %v1294
        %1509 = vst.msk [vmem:[%s226 + $0xd0] sm:$0xff] %vm1482, %v1299
        %1510 = vst.msk [vmem:[%s226 + $0xd8] sm:$0xff] %vm1482, %v1304
        %1511 = vst.msk [vmem:[%s226 + $0xe0] sm:$0xff] %vm1482, %v1309
        %1512 = vst.msk [vmem:[%s226 + $0xe8] sm:$0xff] %vm1482, %v1314
        %1513 = vst.msk [vmem:[%s226 + $0xf0] sm:$0xff] %vm1482, %v1319
        %1514 = vst.msk [vmem:[%s226 + $0xf8] sm:$0xff] %vm1482, %v1324
        %1515 = vst.msk [vmem:[%s226 + $0x100] sm:$0xff] %vm1482, %v1329
        %1516 = vst.msk [vmem:[%s226 + $0x108] sm:$0xff] %vm1482, %v1334
        %1517 = vst.msk [vmem:[%s226 + $0x110] sm:$0xff] %vm1482, %v1339
        %1518 = vst.msk [vmem:[%s226 + $0x118] sm:$0xff] %vm1482, %v1344
        %1519 = vst.msk [vmem:[%s226 + $0x120] sm:$0xff] %vm1482, %v1349
        %1520 = vst.msk [vmem:[%s226 + $0x128] sm:$0xff] %vm1482, %v1354
        %1521 = vst.msk [vmem:[%s226 + $0x130] sm:$0xff] %vm1482, %v1359
        %1522 = vst.msk [vmem:[%s226 + $0x138] sm:$0xff] %vm1482, %v1364
        %1523 = vst.msk [vmem:[%s226 + $0x140] sm:$0xff] %vm1482, %v1369
        %1524 = vst.msk [vmem:[%s226 + $0x148] sm:$0xff] %vm1482, %v1374
        %1525 = vst.msk [vmem:[%s226 + $0x150] sm:$0xff] %vm1482, %v1379
        %1526 = vst.msk [vmem:[%s226 + $0x158] sm:$0xff] %vm1482, %v1384
        %1527 = vst.msk [vmem:[%s226 + $0x160] sm:$0xff] %vm1482, %v1389
        %1528 = vst.msk [vmem:[%s226 + $0x168] sm:$0xff] %vm1482, %v1394
        %1529 = vst.msk [vmem:[%s226 + $0x170] sm:$0xff] %vm1482, %v1399
        %1530 = vst.msk [vmem:[%s226 + $0x178] sm:$0xff] %vm1482, %v1404
        %1531 = vst.msk [vmem:[%s226 + $0x180] sm:$0xff] %vm1482, %v1409
        %1532 = vst.msk [vmem:[%s226 + $0x188] sm:$0xff] %vm1482, %v1414
        %1533 = vst.msk [vmem:[%s226 + $0x190] sm:$0xff] %vm1482, %v1419
        %1534 = vst.msk [vmem:[%s226 + $0x198] sm:$0xff] %vm1482, %v1424
        %1535 = vst.msk [vmem:[%s226 + $0x1a0] sm:$0xff] %vm1482, %v1429
        %1536 = vst.msk [vmem:[%s226 + $0x1a8] sm:$0xff] %vm1482, %v1434
        %1537 = vst.msk [vmem:[%s226 + $0x1b0] sm:$0xff] %vm1482, %v1439
        %1538 = vst.msk [vmem:[%s226 + $0x1b8] sm:$0xff] %vm1482, %v1444
        %1539 = vst.msk [vmem:[%s226 + $0x1c0] sm:$0xff] %vm1482, %v1449
        %1540 = vst.msk [vmem:[%s226 + $0x1c8] sm:$0xff] %vm1482, %v1454
        %1541 = vst.msk [vmem:[%s226 + $0x1d0] sm:$0xff] %vm1482, %v1459
        %1542 = vst.msk [vmem:[%s226 + $0x1d8] sm:$0xff] %vm1482, %v1464
        %1543 = vst.msk [vmem:[%s226 + $0x1e0] sm:$0xff] %vm1482, %v1469
        %1544 = vst.msk [vmem:[%s226 + $0x1e8] sm:$0xff] %vm1482, %v1474
        %1545 = vst.msk [vmem:[%s226 + $0x1f0] sm:$0xff] %vm1482, %v1479
        %s1546 = sand.u32 %s134, 1
        %s1547 = sand.u32 %s134, 1
        %s1548 = smul.addr %s1547, 504
        %s1549 = scalar_lea.vmem [#allocation2], %s1548
        // Predicated region
        $region41: #{tpu_custom_call.1} parent=39 // pred_check
          %p1550 = pneg %p144
        $region42: #{tpu_custom_call.1} parent=39 // pred_check_branch
          %1552 = sbr.rel (%p1550) target = $region44
        $region43: #{tpu_custom_call.1} parent=39 // pred_region
          %s1553 = smul.u32 63, %s16
          %s1554 = ssub.s32 125, %s1553
          %p1555 = scmp.lt.s32.totalorder %s1554, 63
          %s1556 = scalar_select %p1555, %s1554, 63
          %s1557 = smul.u32 128, %s1556
          %p1558 = scmp.ne.s32.totalorder 0, %s1557
          %s1559 = smul.addr %s1553, 8
          %s1560 = scalar_lea.vmem %s5, %s1559
          // Predicated region
          $region45: #{tpu_custom_call.1} parent=43 // pred_check
            %p1561 = pneg %p1558
          $region46: #{tpu_custom_call.1} parent=43 // pred_check_branch
            %1563 = sbr.rel (%p1561) target = $region48
          $region47: #{tpu_custom_call.1} parent=43 // pred_region
            // Predicated region
            $region49: #{tpu_custom_call.1} parent=47 // pred_check
              _
            $region50: #{tpu_custom_call.1} parent=47 // pred_check_branch
              %1565 = sbr.rel (0) target = $region52
            $region51: #{tpu_custom_call.1} parent=47 // pred_region
              // Predicated region
              $region71: #{tpu_custom_call.1} parent=51 // pred_check
                _
              $region72: #{tpu_custom_call.1} parent=51 // pred_check_branch
                %1739 = sbr.rel (0) target = $region74
              $region73: #{tpu_custom_call.1} parent=51 // pred_region
                %s1740 = sdiv.u32.pop %s1556, 63
                %s1741 = srem.u32.pop %s1556, 63
                // While loop
                $region75: #{tpu_custom_call.1} parent=73 // loop_pre_header
                  _
                $region76: #{tpu_custom_call.1} parent=73 // loop_header
                  %s1743 = sphi 0, %s1745
                  %p1744 = scmp.ge.s32.totalorder %s1743, %s1740
                  %s1748 = sphi 0, %s1879
                  %s1749 = sphi %s1549, %s1882
                  %s1750 = sphi %s1560, %s1883
                $region77: #{tpu_custom_call.1} parent=73 // loop_header_branch
                  %1747 = sbr.rel (%p1744) target = $region81
                $region78: #{tpu_custom_call.1} parent=73 // loop_body
                  %v1751 = vld [vmem:[%s1749] sm:$0xff]
                  %1752 = vst [vmem:[%s1750] sm:$0xff] %v1751
                  %v1753 = vld [vmem:[%s1749 + $0x8] sm:$0xff]
                  %1754 = vst [vmem:[%s1750 + $0x8] sm:$0xff] %v1753
                  %v1755 = vld [vmem:[%s1749 + $0x10] sm:$0xff]
                  %1756 = vst [vmem:[%s1750 + $0x10] sm:$0xff] %v1755
                  %v1757 = vld [vmem:[%s1749 + $0x18] sm:$0xff]
                  %1758 = vst [vmem:[%s1750 + $0x18] sm:$0xff] %v1757
                  %v1759 = vld [vmem:[%s1749 + $0x20] sm:$0xff]
                  %1760 = vst [vmem:[%s1750 + $0x20] sm:$0xff] %v1759
                  %v1761 = vld [vmem:[%s1749 + $0x28] sm:$0xff]
                  %1762 = vst [vmem:[%s1750 + $0x28] sm:$0xff] %v1761
                  %v1763 = vld [vmem:[%s1749 + $0x30] sm:$0xff]
                  %1764 = vst [vmem:[%s1750 + $0x30] sm:$0xff] %v1763
                  %v1765 = vld [vmem:[%s1749 + $0x38] sm:$0xff]
                  %1766 = vst [vmem:[%s1750 + $0x38] sm:$0xff] %v1765
                  %v1767 = vld [vmem:[%s1749 + $0x40] sm:$0xff]
                  %1768 = vst [vmem:[%s1750 + $0x40] sm:$0xff] %v1767
                  %v1769 = vld [vmem:[%s1749 + $0x48] sm:$0xff]
                  %1770 = vst [vmem:[%s1750 + $0x48] sm:$0xff] %v1769
                  %v1771 = vld [vmem:[%s1749 + $0x50] sm:$0xff]
                  %1772 = vst [vmem:[%s1750 + $0x50] sm:$0xff] %v1771
                  %v1773 = vld [vmem:[%s1749 + $0x58] sm:$0xff]
                  %1774 = vst [vmem:[%s1750 + $0x58] sm:$0xff] %v1773
                  %v1775 = vld [vmem:[%s1749 + $0x60] sm:$0xff]
                  %1776 = vst [vmem:[%s1750 + $0x60] sm:$0xff] %v1775
                  %v1777 = vld [vmem:[%s1749 + $0x68] sm:$0xff]
                  %1778 = vst [vmem:[%s1750 + $0x68] sm:$0xff] %v1777
                  %v1779 = vld [vmem:[%s1749 + $0x70] sm:$0xff]
                  %1780 = vst [vmem:[%s1750 + $0x70] sm:$0xff] %v1779
                  %v1781 = vld [vmem:[%s1749 + $0x78] sm:$0xff]
                  %1782 = vst [vmem:[%s1750 + $0x78] sm:$0xff] %v1781
                  %v1783 = vld [vmem:[%s1749 + $0x80] sm:$0xff]
                  %1784 = vst [vmem:[%s1750 + $0x80] sm:$0xff] %v1783
                  %v1785 = vld [vmem:[%s1749 + $0x88] sm:$0xff]
                  %1786 = vst [vmem:[%s1750 + $0x88] sm:$0xff] %v1785
                  %v1787 = vld [vmem:[%s1749 + $0x90] sm:$0xff]
                  %1788 = vst [vmem:[%s1750 + $0x90] sm:$0xff] %v1787
                  %v1789 = vld [vmem:[%s1749 + $0x98] sm:$0xff]
                  %1790 = vst [vmem:[%s1750 + $0x98] sm:$0xff] %v1789
                  %v1791 = vld [vmem:[%s1749 + $0xa0] sm:$0xff]
                  %1792 = vst [vmem:[%s1750 + $0xa0] sm:$0xff] %v1791
                  %v1793 = vld [vmem:[%s1749 + $0xa8] sm:$0xff]
                  %1794 = vst [vmem:[%s1750 + $0xa8] sm:$0xff] %v1793
                  %v1795 = vld [vmem:[%s1749 + $0xb0] sm:$0xff]
                  %1796 = vst [vmem:[%s1750 + $0xb0] sm:$0xff] %v1795
                  %v1797 = vld [vmem:[%s1749 + $0xb8] sm:$0xff]
                  %1798 = vst [vmem:[%s1750 + $0xb8] sm:$0xff] %v1797
                  %v1799 = vld [vmem:[%s1749 + $0xc0] sm:$0xff]
                  %1800 = vst [vmem:[%s1750 + $0xc0] sm:$0xff] %v1799
                  %v1801 = vld [vmem:[%s1749 + $0xc8] sm:$0xff]
                  %1802 = vst [vmem:[%s1750 + $0xc8] sm:$0xff] %v1801
                  %v1803 = vld [vmem:[%s1749 + $0xd0] sm:$0xff]
                  %1804 = vst [vmem:[%s1750 + $0xd0] sm:$0xff] %v1803
                  %v1805 = vld [vmem:[%s1749 + $0xd8] sm:$0xff]
                  %1806 = vst [vmem:[%s1750 + $0xd8] sm:$0xff] %v1805
                  %v1807 = vld [vmem:[%s1749 + $0xe0] sm:$0xff]
                  %1808 = vst [vmem:[%s1750 + $0xe0] sm:$0xff] %v1807
                  %v1809 = vld [vmem:[%s1749 + $0xe8] sm:$0xff]
                  %1810 = vst [vmem:[%s1750 + $0xe8] sm:$0xff] %v1809
                  %v1811 = vld [vmem:[%s1749 + $0xf0] sm:$0xff]
                  %1812 = vst [vmem:[%s1750 + $0xf0] sm:$0xff] %v1811
                  %v1813 = vld [vmem:[%s1749 + $0xf8] sm:$0xff]
                  %1814 = vst [vmem:[%s1750 + $0xf8] sm:$0xff] %v1813
                  %v1815 = vld [vmem:[%s1749 + $0x100] sm:$0xff]
                  %1816 = vst [vmem:[%s1750 + $0x100] sm:$0xff] %v1815
                  %v1817 = vld [vmem:[%s1749 + $0x108] sm:$0xff]
                  %1818 = vst [vmem:[%s1750 + $0x108] sm:$0xff] %v1817
                  %v1819 = vld [vmem:[%s1749 + $0x110] sm:$0xff]
                  %1820 = vst [vmem:[%s1750 + $0x110] sm:$0xff] %v1819
                  %v1821 = vld [vmem:[%s1749 + $0x118] sm:$0xff]
                  %1822 = vst [vmem:[%s1750 + $0x118] sm:$0xff] %v1821
                  %v1823 = vld [vmem:[%s1749 + $0x120] sm:$0xff]
                  %1824 = vst [vmem:[%s1750 + $0x120] sm:$0xff] %v1823
                  %v1825 = vld [vmem:[%s1749 + $0x128] sm:$0xff]
                  %1826 = vst [vmem:[%s1750 + $0x128] sm:$0xff] %v1825
                  %v1827 = vld [vmem:[%s1749 + $0x130] sm:$0xff]
                  %1828 = vst [vmem:[%s1750 + $0x130] sm:$0xff] %v1827
                  %v1829 = vld [vmem:[%s1749 + $0x138] sm:$0xff]
                  %1830 = vst [vmem:[%s1750 + $0x138] sm:$0xff] %v1829
                  %v1831 = vld [vmem:[%s1749 + $0x140] sm:$0xff]
                  %1832 = vst [vmem:[%s1750 + $0x140] sm:$0xff] %v1831
                  %v1833 = vld [vmem:[%s1749 + $0x148] sm:$0xff]
                  %1834 = vst [vmem:[%s1750 + $0x148] sm:$0xff] %v1833
                  %v1835 = vld [vmem:[%s1749 + $0x150] sm:$0xff]
                  %1836 = vst [vmem:[%s1750 + $0x150] sm:$0xff] %v1835
                  %v1837 = vld [vmem:[%s1749 + $0x158] sm:$0xff]
                  %1838 = vst [vmem:[%s1750 + $0x158] sm:$0xff] %v1837
                  %v1839 = vld [vmem:[%s1749 + $0x160] sm:$0xff]
                  %1840 = vst [vmem:[%s1750 + $0x160] sm:$0xff] %v1839
                  %v1841 = vld [vmem:[%s1749 + $0x168] sm:$0xff]
                  %1842 = vst [vmem:[%s1750 + $0x168] sm:$0xff] %v1841
                  %v1843 = vld [vmem:[%s1749 + $0x170] sm:$0xff]
                  %1844 = vst [vmem:[%s1750 + $0x170] sm:$0xff] %v1843
                  %v1845 = vld [vmem:[%s1749 + $0x178] sm:$0xff]
                  %1846 = vst [vmem:[%s1750 + $0x178] sm:$0xff] %v1845
                  %v1847 = vld [vmem:[%s1749 + $0x180] sm:$0xff]
                  %1848 = vst [vmem:[%s1750 + $0x180] sm:$0xff] %v1847
                  %v1849 = vld [vmem:[%s1749 + $0x188] sm:$0xff]
                  %1850 = vst [vmem:[%s1750 + $0x188] sm:$0xff] %v1849
                  %v1851 = vld [vmem:[%s1749 + $0x190] sm:$0xff]
                  %1852 = vst [vmem:[%s1750 + $0x190] sm:$0xff] %v1851
                  %v1853 = vld [vmem:[%s1749 + $0x198] sm:$0xff]
                  %1854 = vst [vmem:[%s1750 + $0x198] sm:$0xff] %v1853
                  %v1855 = vld [vmem:[%s1749 + $0x1a0] sm:$0xff]
                  %1856 = vst [vmem:[%s1750 + $0x1a0] sm:$0xff] %v1855
                  %v1857 = vld [vmem:[%s1749 + $0x1a8] sm:$0xff]
                  %1858 = vst [vmem:[%s1750 + $0x1a8] sm:$0xff] %v1857
                  %v1859 = vld [vmem:[%s1749 + $0x1b0] sm:$0xff]
                  %1860 = vst [vmem:[%s1750 + $0x1b0] sm:$0xff] %v1859
                  %v1861 = vld [vmem:[%s1749 + $0x1b8] sm:$0xff]
                  %1862 = vst [vmem:[%s1750 + $0x1b8] sm:$0xff] %v1861
                  %v1863 = vld [vmem:[%s1749 + $0x1c0] sm:$0xff]
                  %1864 = vst [vmem:[%s1750 + $0x1c0] sm:$0xff] %v1863
                  %v1865 = vld [vmem:[%s1749 + $0x1c8] sm:$0xff]
                  %1866 = vst [vmem:[%s1750 + $0x1c8] sm:$0xff] %v1865
                  %v1867 = vld [vmem:[%s1749 + $0x1d0] sm:$0xff]
                  %1868 = vst [vmem:[%s1750 + $0x1d0] sm:$0xff] %v1867
                  %v1869 = vld [vmem:[%s1749 + $0x1d8] sm:$0xff]
                  %1870 = vst [vmem:[%s1750 + $0x1d8] sm:$0xff] %v1869
                  %v1871 = vld [vmem:[%s1749 + $0x1e0] sm:$0xff]
                  %1872 = vst [vmem:[%s1750 + $0x1e0] sm:$0xff] %v1871
                  %v1873 = vld [vmem:[%s1749 + $0x1e8] sm:$0xff]
                  %1874 = vst [vmem:[%s1750 + $0x1e8] sm:$0xff] %v1873
                  %v1875 = vld [vmem:[%s1749 + $0x1f0] sm:$0xff]
                  %1876 = vst [vmem:[%s1750 + $0x1f0] sm:$0xff] %v1875
                  %s1877 = sadd.s32 1, %s1748
                  %p1878 = scmp.ge.s32.totalorder %s1877, %s1740
                  %s1879 = scalar_select %p1878, 0, %s1877
                  %s1880 = smul.u32 %s1879, 504
                  %s1881 = smul.u32 %s1879, 504
                  %s1882 = scalar_lea.vmem %s1549, %s1880 [#allocation2]
                  %s1883 = scalar_lea.vmem %s1560, %s1881
                $region79: #{tpu_custom_call.1} parent=73 // loop_footer
                  %s1745 = sadd.s32 %s1743, 1
                $region80: #{tpu_custom_call.1} parent=73 // loop_footer_branch
                  %1742 = sbr.rel target = $region76
                $region81: #{tpu_custom_call.1} parent=73 // loop_exit
                  _
                %s1884 = sdiv.u32.pop %s1556, 63
                %s1885 = srem.u32.pop %s1556, 63
                %s1886 = smul.u32 %s1884, 63
                %s1887 = smul.u32 8, %s1886
                %s1888 = scalar_lea.vmem %s1549, %s1887 [#allocation2]
                %s1889 = smul.u32 8, %s1886
                %s1890 = scalar_lea.vmem %s1560, %s1889
                // While loop
                $region82: #{tpu_custom_call.1} parent=73 // loop_pre_header
                  _
                $region83: #{tpu_custom_call.1} parent=73 // loop_header
                  %s1892 = sphi 0, %s1894
                  %p1893 = scmp.ge.s32.totalorder %s1892, %s1885
                  %s1897 = sphi 0, %s1904
                  %s1898 = sphi %s1888, %s1907
                  %s1899 = sphi %s1890, %s1908
                $region84: #{tpu_custom_call.1} parent=73 // loop_header_branch
                  %1896 = sbr.rel (%p1893) target = $region88
                $region85: #{tpu_custom_call.1} parent=73 // loop_body
                  %v1900 = vld [vmem:[%s1898] sm:$0xff]
                  %1901 = vst [vmem:[%s1899] sm:$0xff] %v1900
                  %s1902 = sadd.s32 1, %s1897
                  %p1903 = scmp.ge.s32.totalorder %s1902, %s1885
                  %s1904 = scalar_select %p1903, 0, %s1902
                  %s1905 = smul.u32 %s1904, 8
                  %s1906 = smul.u32 %s1904, 8
                  %s1907 = scalar_lea.vmem %s1888, %s1905 [#allocation2]
                  %s1908 = scalar_lea.vmem %s1890, %s1906
                $region86: #{tpu_custom_call.1} parent=73 // loop_footer
                  %s1894 = sadd.s32 %s1892, 1
                $region87: #{tpu_custom_call.1} parent=73 // loop_footer_branch
                  %1891 = sbr.rel target = $region83
                $region88: #{tpu_custom_call.1} parent=73 // loop_exit
                  _
              $region74: #{tpu_custom_call.1} parent=51 // pred_fallthru
                _
              // Predicated region
              $region89: #{tpu_custom_call.1} parent=51 // pred_check
                _
              $region90: #{tpu_custom_call.1} parent=51 // pred_check_branch
                %1910 = sbr.rel target = $region92
              $region91: #{tpu_custom_call.1} parent=51 // pred_region
                _
              $region92: #{tpu_custom_call.1} parent=51 // pred_fallthru
                _
            $region52: #{tpu_custom_call.1} parent=47 // pred_fallthru
              _
            // Predicated region
            $region53: #{tpu_custom_call.1} parent=47 // pred_check
              _
            $region54: #{tpu_custom_call.1} parent=47 // pred_check_branch
              %1567 = sbr.rel target = $region56
            $region55: #{tpu_custom_call.1} parent=47 // pred_region
              %s1569 = sdiv.u32.pop %s1556, 63
              %s1570 = srem.u32.pop %s1556, 63
              // While loop
              $region57: #{tpu_custom_call.1} parent=55 // loop_pre_header
                _
              $region58: #{tpu_custom_call.1} parent=55 // loop_header
                %s1572 = sphi 0, %s1574
                %p1573 = scmp.ge.s32.totalorder %s1572, %s1569
                %s1577 = sphi 0, %s1708
                %s1578 = sphi %s1549, %s1711
                %s1579 = sphi %s1560, %s1712
              $region59: #{tpu_custom_call.1} parent=55 // loop_header_branch
                %1576 = sbr.rel (%p1573) target = $region63
              $region60: #{tpu_custom_call.1} parent=55 // loop_body
                %v1580 = vld [vmem:[%s1578] sm:$0xff]
                %1581 = vst [vmem:[%s1579] sm:$0xff] %v1580
                %v1582 = vld [vmem:[%s1578 + $0x8] sm:$0xff]
                %1583 = vst [vmem:[%s1579 + $0x8] sm:$0xff] %v1582
                %v1584 = vld [vmem:[%s1578 + $0x10] sm:$0xff]
                %1585 = vst [vmem:[%s1579 + $0x10] sm:$0xff] %v1584
                %v1586 = vld [vmem:[%s1578 + $0x18] sm:$0xff]
                %1587 = vst [vmem:[%s1579 + $0x18] sm:$0xff] %v1586
                %v1588 = vld [vmem:[%s1578 + $0x20] sm:$0xff]
                %1589 = vst [vmem:[%s1579 + $0x20] sm:$0xff] %v1588
                %v1590 = vld [vmem:[%s1578 + $0x28] sm:$0xff]
                %1591 = vst [vmem:[%s1579 + $0x28] sm:$0xff] %v1590
                %v1592 = vld [vmem:[%s1578 + $0x30] sm:$0xff]
                %1593 = vst [vmem:[%s1579 + $0x30] sm:$0xff] %v1592
                %v1594 = vld [vmem:[%s1578 + $0x38] sm:$0xff]
                %1595 = vst [vmem:[%s1579 + $0x38] sm:$0xff] %v1594
                %v1596 = vld [vmem:[%s1578 + $0x40] sm:$0xff]
                %1597 = vst [vmem:[%s1579 + $0x40] sm:$0xff] %v1596
                %v1598 = vld [vmem:[%s1578 + $0x48] sm:$0xff]
                %1599 = vst [vmem:[%s1579 + $0x48] sm:$0xff] %v1598
                %v1600 = vld [vmem:[%s1578 + $0x50] sm:$0xff]
                %1601 = vst [vmem:[%s1579 + $0x50] sm:$0xff] %v1600
                %v1602 = vld [vmem:[%s1578 + $0x58] sm:$0xff]
                %1603 = vst [vmem:[%s1579 + $0x58] sm:$0xff] %v1602
                %v1604 = vld [vmem:[%s1578 + $0x60] sm:$0xff]
                %1605 = vst [vmem:[%s1579 + $0x60] sm:$0xff] %v1604
                %v1606 = vld [vmem:[%s1578 + $0x68] sm:$0xff]
                %1607 = vst [vmem:[%s1579 + $0x68] sm:$0xff] %v1606
                %v1608 = vld [vmem:[%s1578 + $0x70] sm:$0xff]
                %1609 = vst [vmem:[%s1579 + $0x70] sm:$0xff] %v1608
                %v1610 = vld [vmem:[%s1578 + $0x78] sm:$0xff]
                %1611 = vst [vmem:[%s1579 + $0x78] sm:$0xff] %v1610
                %v1612 = vld [vmem:[%s1578 + $0x80] sm:$0xff]
                %1613 = vst [vmem:[%s1579 + $0x80] sm:$0xff] %v1612
                %v1614 = vld [vmem:[%s1578 + $0x88] sm:$0xff]
                %1615 = vst [vmem:[%s1579 + $0x88] sm:$0xff] %v1614
                %v1616 = vld [vmem:[%s1578 + $0x90] sm:$0xff]
                %1617 = vst [vmem:[%s1579 + $0x90] sm:$0xff] %v1616
                %v1618 = vld [vmem:[%s1578 + $0x98] sm:$0xff]
                %1619 = vst [vmem:[%s1579 + $0x98] sm:$0xff] %v1618
                %v1620 = vld [vmem:[%s1578 + $0xa0] sm:$0xff]
                %1621 = vst [vmem:[%s1579 + $0xa0] sm:$0xff] %v1620
                %v1622 = vld [vmem:[%s1578 + $0xa8] sm:$0xff]
                %1623 = vst [vmem:[%s1579 + $0xa8] sm:$0xff] %v1622
                %v1624 = vld [vmem:[%s1578 + $0xb0] sm:$0xff]
                %1625 = vst [vmem:[%s1579 + $0xb0] sm:$0xff] %v1624
                %v1626 = vld [vmem:[%s1578 + $0xb8] sm:$0xff]
                %1627 = vst [vmem:[%s1579 + $0xb8] sm:$0xff] %v1626
                %v1628 = vld [vmem:[%s1578 + $0xc0] sm:$0xff]
                %1629 = vst [vmem:[%s1579 + $0xc0] sm:$0xff] %v1628
                %v1630 = vld [vmem:[%s1578 + $0xc8] sm:$0xff]
                %1631 = vst [vmem:[%s1579 + $0xc8] sm:$0xff] %v1630
                %v1632 = vld [vmem:[%s1578 + $0xd0] sm:$0xff]
                %1633 = vst [vmem:[%s1579 + $0xd0] sm:$0xff] %v1632
                %v1634 = vld [vmem:[%s1578 + $0xd8] sm:$0xff]
                %1635 = vst [vmem:[%s1579 + $0xd8] sm:$0xff] %v1634
                %v1636 = vld [vmem:[%s1578 + $0xe0] sm:$0xff]
                %1637 = vst [vmem:[%s1579 + $0xe0] sm:$0xff] %v1636
                %v1638 = vld [vmem:[%s1578 + $0xe8] sm:$0xff]
                %1639 = vst [vmem:[%s1579 + $0xe8] sm:$0xff] %v1638
                %v1640 = vld [vmem:[%s1578 + $0xf0] sm:$0xff]
                %1641 = vst [vmem:[%s1579 + $0xf0] sm:$0xff] %v1640
                %v1642 = vld [vmem:[%s1578 + $0xf8] sm:$0xff]
                %1643 = vst [vmem:[%s1579 + $0xf8] sm:$0xff] %v1642
                %v1644 = vld [vmem:[%s1578 + $0x100] sm:$0xff]
                %1645 = vst [vmem:[%s1579 + $0x100] sm:$0xff] %v1644
                %v1646 = vld [vmem:[%s1578 + $0x108] sm:$0xff]
                %1647 = vst [vmem:[%s1579 + $0x108] sm:$0xff] %v1646
                %v1648 = vld [vmem:[%s1578 + $0x110] sm:$0xff]
                %1649 = vst [vmem:[%s1579 + $0x110] sm:$0xff] %v1648
                %v1650 = vld [vmem:[%s1578 + $0x118] sm:$0xff]
                %1651 = vst [vmem:[%s1579 + $0x118] sm:$0xff] %v1650
                %v1652 = vld [vmem:[%s1578 + $0x120] sm:$0xff]
                %1653 = vst [vmem:[%s1579 + $0x120] sm:$0xff] %v1652
                %v1654 = vld [vmem:[%s1578 + $0x128] sm:$0xff]
                %1655 = vst [vmem:[%s1579 + $0x128] sm:$0xff] %v1654
                %v1656 = vld [vmem:[%s1578 + $0x130] sm:$0xff]
                %1657 = vst [vmem:[%s1579 + $0x130] sm:$0xff] %v1656
                %v1658 = vld [vmem:[%s1578 + $0x138] sm:$0xff]
                %1659 = vst [vmem:[%s1579 + $0x138] sm:$0xff] %v1658
                %v1660 = vld [vmem:[%s1578 + $0x140] sm:$0xff]
                %1661 = vst [vmem:[%s1579 + $0x140] sm:$0xff] %v1660
                %v1662 = vld [vmem:[%s1578 + $0x148] sm:$0xff]
                %1663 = vst [vmem:[%s1579 + $0x148] sm:$0xff] %v1662
                %v1664 = vld [vmem:[%s1578 + $0x150] sm:$0xff]
                %1665 = vst [vmem:[%s1579 + $0x150] sm:$0xff] %v1664
                %v1666 = vld [vmem:[%s1578 + $0x158] sm:$0xff]
                %1667 = vst [vmem:[%s1579 + $0x158] sm:$0xff] %v1666
                %v1668 = vld [vmem:[%s1578 + $0x160] sm:$0xff]
                %1669 = vst [vmem:[%s1579 + $0x160] sm:$0xff] %v1668
                %v1670 = vld [vmem:[%s1578 + $0x168] sm:$0xff]
                %1671 = vst [vmem:[%s1579 + $0x168] sm:$0xff] %v1670
                %v1672 = vld [vmem:[%s1578 + $0x170] sm:$0xff]
                %1673 = vst [vmem:[%s1579 + $0x170] sm:$0xff] %v1672
                %v1674 = vld [vmem:[%s1578 + $0x178] sm:$0xff]
                %1675 = vst [vmem:[%s1579 + $0x178] sm:$0xff] %v1674
                %v1676 = vld [vmem:[%s1578 + $0x180] sm:$0xff]
                %1677 = vst [vmem:[%s1579 + $0x180] sm:$0xff] %v1676
                %v1678 = vld [vmem:[%s1578 + $0x188] sm:$0xff]
                %1679 = vst [vmem:[%s1579 + $0x188] sm:$0xff] %v1678
                %v1680 = vld [vmem:[%s1578 + $0x190] sm:$0xff]
                %1681 = vst [vmem:[%s1579 + $0x190] sm:$0xff] %v1680
                %v1682 = vld [vmem:[%s1578 + $0x198] sm:$0xff]
                %1683 = vst [vmem:[%s1579 + $0x198] sm:$0xff] %v1682
                %v1684 = vld [vmem:[%s1578 + $0x1a0] sm:$0xff]
                %1685 = vst [vmem:[%s1579 + $0x1a0] sm:$0xff] %v1684
                %v1686 = vld [vmem:[%s1578 + $0x1a8] sm:$0xff]
                %1687 = vst [vmem:[%s1579 + $0x1a8] sm:$0xff] %v1686
                %v1688 = vld [vmem:[%s1578 + $0x1b0] sm:$0xff]
                %1689 = vst [vmem:[%s1579 + $0x1b0] sm:$0xff] %v1688
                %v1690 = vld [vmem:[%s1578 + $0x1b8] sm:$0xff]
                %1691 = vst [vmem:[%s1579 + $0x1b8] sm:$0xff] %v1690
                %v1692 = vld [vmem:[%s1578 + $0x1c0] sm:$0xff]
                %1693 = vst [vmem:[%s1579 + $0x1c0] sm:$0xff] %v1692
                %v1694 = vld [vmem:[%s1578 + $0x1c8] sm:$0xff]
                %1695 = vst [vmem:[%s1579 + $0x1c8] sm:$0xff] %v1694
                %v1696 = vld [vmem:[%s1578 + $0x1d0] sm:$0xff]
                %1697 = vst [vmem:[%s1579 + $0x1d0] sm:$0xff] %v1696
                %v1698 = vld [vmem:[%s1578 + $0x1d8] sm:$0xff]
                %1699 = vst [vmem:[%s1579 + $0x1d8] sm:$0xff] %v1698
                %v1700 = vld [vmem:[%s1578 + $0x1e0] sm:$0xff]
                %1701 = vst [vmem:[%s1579 + $0x1e0] sm:$0xff] %v1700
                %v1702 = vld [vmem:[%s1578 + $0x1e8] sm:$0xff]
                %1703 = vst [vmem:[%s1579 + $0x1e8] sm:$0xff] %v1702
                %v1704 = vld [vmem:[%s1578 + $0x1f0] sm:$0xff]
                %1705 = vst [vmem:[%s1579 + $0x1f0] sm:$0xff] %v1704
                %s1706 = sadd.s32 1, %s1577
                %p1707 = scmp.ge.s32.totalorder %s1706, %s1569
                %s1708 = scalar_select %p1707, 0, %s1706
                %s1709 = smul.u32 %s1708, 504
                %s1710 = smul.u32 %s1708, 504
                %s1711 = scalar_lea.vmem %s1549, %s1709 [#allocation2]
                %s1712 = scalar_lea.vmem %s1560, %s1710
              $region61: #{tpu_custom_call.1} parent=55 // loop_footer
                %s1574 = sadd.s32 %s1572, 1
              $region62: #{tpu_custom_call.1} parent=55 // loop_footer_branch
                %1571 = sbr.rel target = $region58
              $region63: #{tpu_custom_call.1} parent=55 // loop_exit
                _
              %s1713 = sdiv.u32.pop %s1556, 63
              %s1714 = srem.u32.pop %s1556, 63
              %s1715 = smul.u32 %s1713, 63
              %s1716 = smul.u32 8, %s1715
              %s1717 = scalar_lea.vmem %s1549, %s1716 [#allocation2]
              %s1718 = smul.u32 8, %s1715
              %s1719 = scalar_lea.vmem %s1560, %s1718
              // While loop
              $region64: #{tpu_custom_call.1} parent=55 // loop_pre_header
                _
              $region65: #{tpu_custom_call.1} parent=55 // loop_header
                %s1721 = sphi 0, %s1723
                %p1722 = scmp.ge.s32.totalorder %s1721, %s1714
                %s1726 = sphi 0, %s1733
                %s1727 = sphi %s1717, %s1736
                %s1728 = sphi %s1719, %s1737
              $region66: #{tpu_custom_call.1} parent=55 // loop_header_branch
                %1725 = sbr.rel (%p1722) target = $region70
              $region67: #{tpu_custom_call.1} parent=55 // loop_body
                %v1729 = vld [vmem:[%s1727] sm:$0xff]
                %1730 = vst [vmem:[%s1728] sm:$0xff] %v1729
                %s1731 = sadd.s32 1, %s1726
                %p1732 = scmp.ge.s32.totalorder %s1731, %s1714
                %s1733 = scalar_select %p1732, 0, %s1731
                %s1734 = smul.u32 %s1733, 8
                %s1735 = smul.u32 %s1733, 8
                %s1736 = scalar_lea.vmem %s1717, %s1734 [#allocation2]
                %s1737 = scalar_lea.vmem %s1719, %s1735
              $region68: #{tpu_custom_call.1} parent=55 // loop_footer
                %s1723 = sadd.s32 %s1721, 1
              $region69: #{tpu_custom_call.1} parent=55 // loop_footer_branch
                %1720 = sbr.rel target = $region65
              $region70: #{tpu_custom_call.1} parent=55 // loop_exit
                _
            $region56: #{tpu_custom_call.1} parent=47 // pred_fallthru
              _
          $region48: #{tpu_custom_call.1} parent=43 // pred_fallthru
            _
          %1911 = vnop
        $region44: #{tpu_custom_call.1} parent=39 // pred_fallthru
          _
      $region40: #{tpu_custom_call.1} parent=5 // pred_fallthru
        _
      %p1912 = scmp.le.s32.totalorder 2, %s11
      // Predicated region
      $region93: #{tpu_custom_call.1} parent=5 // pred_check
        %p1913 = pneg %p1912
      $region94: #{tpu_custom_call.1} parent=5 // pred_check_branch
        %1915 = sbr.rel (%p1913) target = $region96
      $region95: #{tpu_custom_call.1} parent=5 // pred_region
        %s1916 = ssub.s32 %s11, 2
        // Predicated region
        $region97: #{tpu_custom_call.1} parent=95 // pred_check
          %p1917 = pneg %p150
        $region98: #{tpu_custom_call.1} parent=95 // pred_check_branch
          %1919 = sbr.rel (%p1917) target = $region100
        $region99: #{tpu_custom_call.1} parent=95 // pred_region
          %s1920 = sand.u32 %s135, 1
          %s1921 = sand.u32 %s135, 1
          %s1922 = smul.addr %s1921, 504
          %s1923 = scalar_lea.vmem [#allocation2], %s1922
        $region100: #{tpu_custom_call.1} parent=95 // pred_fallthru
          _
      $region96: #{tpu_custom_call.1} parent=5 // pred_fallthru
        _
    $region6: #{tpu_custom_call.1} parent=1 // loop_footer
      %s15 = sadd.s32 1, %s11
    $region7: #{tpu_custom_call.1} parent=1 // loop_footer_branch
      %10 = sbr.rel target = $region3
    $region8: #{tpu_custom_call.1} parent=1 // loop_exit
      _

</llo_original>
